<compile_context>
chip_gen: v6e
topology: v6e:2x2x1
jax: 0.10.0
libtpu: 0.0.40
codegen_flags: <defaults>
</compile_context>

<pallas_src>
import jax
import jax.numpy as jnp
from jax import lax
from jax.experimental import pallas as pl
from jax.experimental.pallas import tpu as pltpu


def gfm_kernel(x1_ref, x2_ref, w1a_ref, w1b_ref, w2a_ref, w2b_ref,
               t_ref, scb_ref, out_ref):
    bt, C, _ = x1_ref.shape          # (batch_tile, C, H*W)
    bias = scb_ref[0]                # scalar conv bias from SMEM

    for i in range(bt):              # static unroll over the (small) batch tile
        x1 = x1_ref[i]               # (C, HW) float32, lane-dense
        x2 = x2_ref[i]

        # ---------------- channel attention ----------------
        a1 = jnp.mean(x1, axis=1, keepdims=True)   # (C, 1)
        m1 = jnp.max(x1, axis=1, keepdims=True)    # (C, 1)
        a2 = jnp.mean(x2, axis=1, keepdims=True)
        m2 = jnp.max(x2, axis=1, keepdims=True)

        # Pack [avg | max] as two columns so the shared MLP processes both
        # pooled vectors in one pass (N=2 dots instead of 2x N=1).
        col = lax.broadcasted_iota(jnp.int32, (C, 2), 1)
        p1 = jnp.where(col == 0, a1, m1)           # (C, 2)
        p2 = jnp.where(col == 0, a2, m2)           # (C, 2)

        h = (jnp.dot(w1a_ref[...], p1, preferred_element_type=jnp.float32) +
             jnp.dot(w1b_ref[...], p2, preferred_element_type=jnp.float32))
        h = jnp.maximum(h, 0.0)                    # (hid, 2)
        y1 = jnp.dot(w2a_ref[...], h, preferred_element_type=jnp.float32)  # (C, 2)
        y2 = jnp.dot(w2b_ref[...], h, preferred_element_type=jnp.float32)  # (C, 2)

        # MLP(avg) + MLP(max) == sum of the two columns.
        cw1 = jax.nn.sigmoid(jnp.sum(y1, axis=1, keepdims=True))  # (C, 1)
        cw2 = jax.nn.sigmoid(jnp.sum(y2, axis=1, keepdims=True))  # (C, 1)

        out = cw1 * x1 + cw2 * x2                  # (C, HW) lane-dense fusion

        # ---------------- spatial attention (7x7 conv as Toeplitz matmul) ----
        mean_row = jnp.mean(out, axis=0, keepdims=True)   # (1, HW)
        max_row = jnp.max(out, axis=0, keepdims=True)     # (1, HW)
        logits = (jnp.dot(mean_row, t_ref[0], preferred_element_type=jnp.float32) +
                  jnp.dot(max_row, t_ref[1], preferred_element_type=jnp.float32) +
                  bias)                                   # (1, HW)
        sa = jax.nn.sigmoid(logits)

        out_ref[i] = (sa * out).astype(out_ref.dtype)


def _spatial_conv_as_matmul(conv_w, H, W):
    """Build T (2, H*W, H*W) so that for row-major flattened images
    conv2d(cat([mean, max]), conv_w, padding=3) == mean_flat @ T[0] + max_flat @ T[1]
    (bias added separately).  T[c, yi*W+xi, yo*W+xo] = w[c, yi-yo+3, xi-xo+3]."""
    K, P = 7, 3
    w = conv_w.reshape(2, K, K).astype(jnp.float32)
    dy = jnp.arange(H)[:, None] - jnp.arange(H)[None, :] + P   # (H, H): yi - yo + 3
    dx = jnp.arange(W)[:, None] - jnp.arange(W)[None, :] + P   # (W, W): xi - xo + 3
    DY = dy[:, None, :, None]                                  # (H, 1, H, 1)
    DX = dx[None, :, None, :]                                  # (1, W, 1, W)
    valid = (DY >= 0) & (DY < K) & (DX >= 0) & (DX < K)        # (H, W, H, W)
    vals = w[:, jnp.clip(DY, 0, K - 1), jnp.clip(DX, 0, K - 1)]  # (2, H, W, H, W)
    T = jnp.where(valid[None], vals, 0.0)
    return T.reshape(2, H * W, H * W)


def gfm_forward(x1, x2, w1, w2, conv_w, conv_b, *, batch_tile=1):
    """x1, x2: (B, C, H, W) float32 (NCHW).  w1: (hid, 2C), w2: (2C, hid),
    conv_w: (1, 2, 7, 7), conv_b: (1,)."""
    B, C, H, W = x1.shape
    hid = w1.shape[0]
    HW = H * W
    assert B % batch_tile == 0

    # Lane-dense layout for the elementwise/pooling/fusion/gating path.
    x1f = x1.reshape(B, C, HW).astype(jnp.float32)
    x2f = x2.reshape(B, C, HW).astype(jnp.float32)

    # Split the 1x1-conv MLP weights so the kernel needs no concat/transpose.
    w1a, w1b = w1[:, :C], w1[:, C:]          # (hid, C) each
    w2a, w2b = w2[:C, :], w2[C:, :]          # (C, hid) each
    t_mat = _spatial_conv_as_matmul(conv_w, H, W)   # (2, HW, HW)
    bias = conv_b.astype(jnp.float32)               # (1,) -> SMEM scalar

    grid_spec = pltpu.PrefetchScalarGridSpec(
        num_scalar_prefetch=0,
        grid=(B // batch_tile,),
        in_specs=[
            pl.BlockSpec((batch_tile, C, HW), lambda b: (b, 0, 0)),   # x1
            pl.BlockSpec((batch_tile, C, HW), lambda b: (b, 0, 0)),   # x2
            pl.BlockSpec((hid, C), lambda b: (0, 0)),                 # w1a
            pl.BlockSpec((hid, C), lambda b: (0, 0)),                 # w1b
            pl.BlockSpec((C, hid), lambda b: (0, 0)),                 # w2a
            pl.BlockSpec((C, hid), lambda b: (0, 0)),                 # w2b
            pl.BlockSpec((2, HW, HW), lambda b: (0, 0, 0)),           # Toeplitz conv
            pl.BlockSpec(memory_space=pltpu.MemorySpace.SMEM),        # conv bias
        ],
        out_specs=pl.BlockSpec((batch_tile, C, HW), lambda b: (b, 0, 0)),
    )

    out_flat = pl.pallas_call(
        gfm_kernel,
        out_shape=jax.ShapeDtypeStruct((B, C, HW), jnp.float32),
        grid_spec=grid_spec,
        # Independent per-batch work: parallel lets v7x shard across its 2 TCs.
        compiler_params=pltpu.CompilerParams(dimension_semantics=("parallel",)),
    )(x1f, x2f, w1a, w1b, w2a, w2b, t_mat, bias)
    return out_flat.reshape(B, C, H, W)


def gfm_reference(x1, x2, w1, w2, conv_w, conv_b):
    """Pure-JAX reference matching the PyTorch GFM.forward."""
    B, C, H, W = x1.shape
    x = jnp.concatenate([x1, x2], axis=1)           # (B, 2C, H, W)
    avg = jnp.mean(x, axis=(2, 3))                  # (B, 2C)
    mx = jnp.max(x, axis=(2, 3))                    # (B, 2C)

    def mlp(v):
        h = jnp.maximum(v @ w1.T, 0.0)
        return h @ w2.T

    c_w = jax.nn.sigmoid(mlp(avg) + mlp(mx))        # (B, 2C)
    cw = c_w.reshape(B, 2, C)[:, :, :, None, None]
    out = cw[:, 0] * x1 + cw[:, 1] * x2             # (B, C, H, W)

    mean_img = jnp.mean(out, axis=1, keepdims=True)
    max_img = jnp.max(out, axis=1, keepdims=True)
    cat = jnp.concatenate([mean_img, max_img], axis=1)  # (B, 2, H, W)
    conv = lax.conv_general_dilated(
        cat, conv_w, window_strides=(1, 1), padding=((3, 3), (3, 3)),
        dimension_numbers=("NCHW", "OIHW", "NCHW"))
    conv = conv + conv_b.reshape(1, 1, 1, 1)
    sa = jax.nn.sigmoid(conv)
    return sa * out


if __name__ == "__main__":
    B, C, H, W = 2, 32, 16, 16          # embed_dim = 32
    hid = (2 * C) // 16                  # ratio = 16 -> hidden = 4

    key = jax.random.PRNGKey(0)
    k0, k1, k2, k3, k4, k5 = jax.random.split(key, 6)
    x1 = jax.random.normal(k0, (B, C, H, W), jnp.float32)
    x2 = jax.random.normal(k1, (B, C, H, W), jnp.float32)
    w1 = jax.random.normal(k2, (hid, 2 * C), jnp.float32) * 0.1   # Conv2d(2C->hid,1x1)
    w2 = jax.random.normal(k3, (2 * C, hid), jnp.float32) * 0.1   # Conv2d(hid->2C,1x1)
    conv_w = jax.random.normal(k4, (1, 2, 7, 7), jnp.float32) * 0.1
    conv_b = jax.random.normal(k5, (1,), jnp.float32) * 0.1

    out = gfm_forward(x1, x2, w1, w2, conv_w, conv_b)
    out = jax.block_until_ready(out)

    ref = gfm_reference(x1, x2, w1, w2, conv_w, conv_b)
    assert out.shape == ref.shape == (B, C, H, W)
    err = float(jnp.max(jnp.abs(out - ref)))
    # Tolerance allows for MXU-matmul vs XLA-conv accumulation-order differences in f32.
    if err > 2e-3:
        raise AssertionError(f"kernel mismatch vs reference: max abs err {err}")

    print("KERNEL_OK")
</pallas_src>

<mosaic_0001>
module attributes {stable_mosaic.version = 11 : i64} {
  func.func @gfm_kernel(%arg0: i32, %arg1: memref<1x32x256xf32, #tpu.memory_space<vmem>>, %arg2: memref<1x32x256xf32, #tpu.memory_space<vmem>>, %arg3: memref<4x32xf32, #tpu.memory_space<vmem>>, %arg4: memref<4x32xf32, #tpu.memory_space<vmem>>, %arg5: memref<32x4xf32, #tpu.memory_space<vmem>>, %arg6: memref<32x4xf32, #tpu.memory_space<vmem>>, %arg7: memref<2x256x256xf32, #tpu.memory_space<vmem>>, %arg8: memref<1xf32, #tpu.memory_space<smem>>, %arg9: memref<1x32x256xf32, #tpu.memory_space<vmem>>) attributes {dimension_semantics = [#tpu.dimension_semantics<parallel>], iteration_bounds = array<i64: 2>, scalar_prefetch = 0 : i64, scratch_operands = 0 : i64, tpu.core_type = #tpu.core_type<tc>, window_params = [{transform_indices = @transform_0, window_bounds = array<i64: 1, 32, 256>}, {transform_indices = @transform_1, window_bounds = array<i64: 1, 32, 256>}, {pipeline_mode = #tpu.pipeline_mode<synchronous>, transform_indices = @transform_2, window_bounds = array<i64: 4, 32>}, {pipeline_mode = #tpu.pipeline_mode<synchronous>, transform_indices = @transform_3, window_bounds = array<i64: 4, 32>}, {pipeline_mode = #tpu.pipeline_mode<synchronous>, transform_indices = @transform_4, window_bounds = array<i64: 32, 4>}, {pipeline_mode = #tpu.pipeline_mode<synchronous>, transform_indices = @transform_5, window_bounds = array<i64: 32, 4>}, {pipeline_mode = #tpu.pipeline_mode<synchronous>, transform_indices = @transform_6, window_bounds = array<i64: 2, 256, 256>}, {transform_indices = @transform_7, window_bounds = array<i64: 1>}, {transform_indices = @transform_8, window_bounds = array<i64: 1, 32, 256>}]} {
    %c0 = arith.constant 0 : index
    %0 = memref.load %arg8[%c0] : memref<1xf32, #tpu.memory_space<smem>>
    %c0_0 = arith.constant 0 : index
    %c0_1 = arith.constant 0 : index
    %c0_2 = arith.constant 0 : index
    %1 = vector.load %arg1[%c0_0, %c0_1, %c0_2] : memref<1x32x256xf32, #tpu.memory_space<vmem>>, vector<1x32x256xf32>
    %2 = vector.shape_cast %1 : vector<1x32x256xf32> to vector<32x256xf32>
    %c0_3 = arith.constant 0 : index
    %c0_4 = arith.constant 0 : index
    %c0_5 = arith.constant 0 : index
    %3 = vector.load %arg2[%c0_3, %c0_4, %c0_5] : memref<1x32x256xf32, #tpu.memory_space<vmem>>, vector<1x32x256xf32>
    %4 = vector.shape_cast %3 : vector<1x32x256xf32> to vector<32x256xf32>
    %cst = arith.constant dense<0.000000e+00> : vector<32xf32>
    %5 = vector.multi_reduction <add>, %2, %cst [1] : vector<32x256xf32> to vector<32xf32>
    %6 = vector.shape_cast %5 : vector<32xf32> to vector<32x1xf32>
    %cst_6 = arith.constant 2.560000e+02 : f32
    %7 = vector.broadcast %cst_6 : f32 to vector<32x1xf32>
    %8 = arith.divf %6, %7 : vector<32x1xf32>
    %cst_7 = arith.constant dense<0xFF800000> : vector<32xf32>
    %9 = vector.multi_reduction <maximumf>, %2, %cst_7 [1] : vector<32x256xf32> to vector<32xf32>
    %10 = vector.shape_cast %9 : vector<32xf32> to vector<32x1xf32>
    %cst_8 = arith.constant dense<0.000000e+00> : vector<32xf32>
    %11 = vector.multi_reduction <add>, %4, %cst_8 [1] : vector<32x256xf32> to vector<32xf32>
    %12 = vector.shape_cast %11 : vector<32xf32> to vector<32x1xf32>
    %cst_9 = arith.constant 2.560000e+02 : f32
    %13 = vector.broadcast %cst_9 : f32 to vector<32x1xf32>
    %14 = arith.divf %12, %13 : vector<32x1xf32>
    %cst_10 = arith.constant dense<0xFF800000> : vector<32xf32>
    %15 = vector.multi_reduction <maximumf>, %4, %cst_10 [1] : vector<32x256xf32> to vector<32xf32>
    %16 = vector.shape_cast %15 : vector<32xf32> to vector<32x1xf32>
    %17 = tpu.iota {dimensions = array<i32: 1>} : vector<32x2xi32>
    %c0_i32 = arith.constant 0 : i32
    %18 = vector.broadcast %c0_i32 : i32 to vector<32x2xi32>
    %19 = arith.cmpi eq, %17, %18 : vector<32x2xi32>
    %20 = vector.shape_cast %8 : vector<32x1xf32> to vector<32x1xf32>
    %21 = vector.broadcast %20 : vector<32x1xf32> to vector<32x2xf32>
    %22 = vector.shape_cast %10 : vector<32x1xf32> to vector<32x1xf32>
    %23 = vector.broadcast %22 : vector<32x1xf32> to vector<32x2xf32>
    %24 = arith.select %19, %21, %23 : vector<32x2xi1>, vector<32x2xf32>
    %c0_i32_11 = arith.constant 0 : i32
    %25 = vector.broadcast %c0_i32_11 : i32 to vector<32x2xi32>
    %26 = arith.cmpi eq, %17, %25 : vector<32x2xi32>
    %27 = vector.shape_cast %14 : vector<32x1xf32> to vector<32x1xf32>
    %28 = vector.broadcast %27 : vector<32x1xf32> to vector<32x2xf32>
    %29 = vector.shape_cast %16 : vector<32x1xf32> to vector<32x1xf32>
    %30 = vector.broadcast %29 : vector<32x1xf32> to vector<32x2xf32>
    %31 = arith.select %26, %28, %30 : vector<32x2xi1>, vector<32x2xf32>
    %c0_12 = arith.constant 0 : index
    %c0_13 = arith.constant 0 : index
    %32 = vector.load %arg3[%c0_12, %c0_13] : memref<4x32xf32, #tpu.memory_space<vmem>>, vector<4x32xf32>
    %cst_14 = arith.constant dense<0.000000e+00> : vector<4x2xf32>
    %33 = tpu.matmul %32, %24, %cst_14 {dimension_numbers = #tpu.dot_dimension_numbers<[1], [0], [0], [1], [0, 0, 1, 1], [], []>} : vector<4x32xf32>, vector<32x2xf32>, vector<4x2xf32> -> vector<4x2xf32>
    %c0_15 = arith.constant 0 : index
    %c0_16 = arith.constant 0 : index
    %34 = vector.load %arg4[%c0_15, %c0_16] : memref<4x32xf32, #tpu.memory_space<vmem>>, vector<4x32xf32>
    %cst_17 = arith.constant dense<0.000000e+00> : vector<4x2xf32>
    %35 = tpu.matmul %34, %31, %cst_17 {dimension_numbers = #tpu.dot_dimension_numbers<[1], [0], [0], [1], [0, 0, 1, 1], [], []>} : vector<4x32xf32>, vector<32x2xf32>, vector<4x2xf32> -> vector<4x2xf32>
    %36 = arith.addf %33, %35 : vector<4x2xf32>
    %cst_18 = arith.constant 0.000000e+00 : f32
    %37 = vector.broadcast %cst_18 : f32 to vector<4x2xf32>
    %38 = arith.maximumf %36, %37 : vector<4x2xf32>
    %c0_19 = arith.constant 0 : index
    %c0_20 = arith.constant 0 : index
    %39 = vector.load %arg5[%c0_19, %c0_20] : memref<32x4xf32, #tpu.memory_space<vmem>>, vector<32x4xf32>
    %cst_21 = arith.constant dense<0.000000e+00> : vector<32x2xf32>
    %40 = tpu.matmul %39, %38, %cst_21 {dimension_numbers = #tpu.dot_dimension_numbers<[1], [0], [0], [1], [0, 0, 1, 1], [], []>} : vector<32x4xf32>, vector<4x2xf32>, vector<32x2xf32> -> vector<32x2xf32>
    %c0_22 = arith.constant 0 : index
    %c0_23 = arith.constant 0 : index
    %41 = vector.load %arg6[%c0_22, %c0_23] : memref<32x4xf32, #tpu.memory_space<vmem>>, vector<32x4xf32>
    %cst_24 = arith.constant dense<0.000000e+00> : vector<32x2xf32>
    %42 = tpu.matmul %41, %38, %cst_24 {dimension_numbers = #tpu.dot_dimension_numbers<[1], [0], [0], [1], [0, 0, 1, 1], [], []>} : vector<32x4xf32>, vector<4x2xf32>, vector<32x2xf32> -> vector<32x2xf32>
    %cst_25 = arith.constant dense<0.000000e+00> : vector<32xf32>
    %43 = vector.multi_reduction <add>, %40, %cst_25 [1] : vector<32x2xf32> to vector<32xf32>
    %44 = vector.shape_cast %43 : vector<32xf32> to vector<32x1xf32>
    %45 = arith.negf %44 : vector<32x1xf32>
    %46 = math.exp %45 : vector<32x1xf32>
    %cst_26 = arith.constant 1.000000e+00 : f32
    %47 = vector.broadcast %cst_26 : f32 to vector<32x1xf32>
    %48 = arith.addf %47, %46 : vector<32x1xf32>
    %49 = arith.divf %47, %48 : vector<32x1xf32>
    %cst_27 = arith.constant dense<0.000000e+00> : vector<32xf32>
    %50 = vector.multi_reduction <add>, %42, %cst_27 [1] : vector<32x2xf32> to vector<32xf32>
    %51 = vector.shape_cast %50 : vector<32xf32> to vector<32x1xf32>
    %52 = arith.negf %51 : vector<32x1xf32>
    %53 = math.exp %52 : vector<32x1xf32>
    %cst_28 = arith.constant 1.000000e+00 : f32
    %54 = vector.broadcast %cst_28 : f32 to vector<32x1xf32>
    %55 = arith.addf %54, %53 : vector<32x1xf32>
    %56 = arith.divf %54, %55 : vector<32x1xf32>
    %57 = vector.broadcast %49 : vector<32x1xf32> to vector<32x256xf32>
    %58 = arith.mulf %57, %2 : vector<32x256xf32>
    %59 = vector.broadcast %56 : vector<32x1xf32> to vector<32x256xf32>
    %60 = arith.mulf %59, %4 : vector<32x256xf32>
    %61 = arith.addf %58, %60 : vector<32x256xf32>
    %cst_29 = arith.constant dense<0.000000e+00> : vector<256xf32>
    %62 = vector.multi_reduction <add>, %61, %cst_29 [0] : vector<32x256xf32> to vector<256xf32>
    %63 = vector.shape_cast %62 : vector<256xf32> to vector<1x256xf32>
    %cst_30 = arith.constant 3.200000e+01 : f32
    %64 = vector.broadcast %cst_30 : f32 to vector<1x256xf32>
    %65 = arith.divf %63, %64 : vector<1x256xf32>
    %cst_31 = arith.constant dense<0xFF800000> : vector<256xf32>
    %66 = vector.multi_reduction <maximumf>, %61, %cst_31 [0] : vector<32x256xf32> to vector<256xf32>
    %67 = vector.shape_cast %66 : vector<256xf32> to vector<1x256xf32>
    %c0_32 = arith.constant 0 : index
    %c0_33 = arith.constant 0 : index
    %c0_34 = arith.constant 0 : index
    %68 = vector.load %arg7[%c0_32, %c0_33, %c0_34] : memref<2x256x256xf32, #tpu.memory_space<vmem>>, vector<1x256x256xf32>
    %69 = vector.shape_cast %68 : vector<1x256x256xf32> to vector<256x256xf32>
    %cst_35 = arith.constant dense<0.000000e+00> : vector<1x256xf32>
    %70 = tpu.matmul %65, %69, %cst_35 {dimension_numbers = #tpu.dot_dimension_numbers<[1], [0], [0], [1], [0, 0, 1, 1], [], []>} : vector<1x256xf32>, vector<256x256xf32>, vector<1x256xf32> -> vector<1x256xf32>
    %c1 = arith.constant 1 : index
    %c0_36 = arith.constant 0 : index
    %c0_37 = arith.constant 0 : index
    %71 = vector.load %arg7[%c1, %c0_36, %c0_37] : memref<2x256x256xf32, #tpu.memory_space<vmem>>, vector<1x256x256xf32>
    %72 = vector.shape_cast %71 : vector<1x256x256xf32> to vector<256x256xf32>
    %cst_38 = arith.constant dense<0.000000e+00> : vector<1x256xf32>
    %73 = tpu.matmul %67, %72, %cst_38 {dimension_numbers = #tpu.dot_dimension_numbers<[1], [0], [0], [1], [0, 0, 1, 1], [], []>} : vector<1x256xf32>, vector<256x256xf32>, vector<1x256xf32> -> vector<1x256xf32>
    %74 = arith.addf %70, %73 : vector<1x256xf32>
    %75 = vector.broadcast %0 : f32 to vector<1x256xf32>
    %76 = arith.addf %74, %75 : vector<1x256xf32>
    %77 = arith.negf %76 : vector<1x256xf32>
    %78 = math.exp %77 : vector<1x256xf32>
    %cst_39 = arith.constant 1.000000e+00 : f32
    %79 = vector.broadcast %cst_39 : f32 to vector<1x256xf32>
    %80 = arith.addf %79, %78 : vector<1x256xf32>
    %81 = arith.divf %79, %80 : vector<1x256xf32>
    %82 = vector.broadcast %81 : vector<1x256xf32> to vector<32x256xf32>
    %83 = arith.mulf %82, %61 : vector<32x256xf32>
    %c0_40 = arith.constant 0 : index
    %c0_41 = arith.constant 0 : index
    %c0_42 = arith.constant 0 : index
    %84 = vector.load %arg9[%c0_40, %c0_41, %c0_42] : memref<1x32x256xf32, #tpu.memory_space<vmem>>, vector<1x32x256xf32>
    %85 = vector.shape_cast %84 : vector<1x32x256xf32> to vector<32x256xf32>
    %86 = vector.shape_cast %83 : vector<32x256xf32> to vector<1x32x256xf32>
    tpu.vector_store %arg9[%c0_40, %c0_41, %c0_42], %86 {strides = array<i32>} : memref<1x32x256xf32, #tpu.memory_space<vmem>>, vector<1x32x256xf32>,
    return
  }
  func.func @transform_0(%arg0: i32) -> (i32, i32, i32) {
    %c0_i32 = arith.constant 0 : i32
    %c0_i32_0 = arith.constant 0 : i32
    %c0_i32_1 = arith.constant 0 : i32
    return %arg0, %c0_i32, %c0_i32_0 : i32, i32, i32
  }
  func.func @transform_1(%arg0: i32) -> (i32, i32, i32) {
    %c0_i32 = arith.constant 0 : i32
    %c0_i32_0 = arith.constant 0 : i32
    %c0_i32_1 = arith.constant 0 : i32
    return %arg0, %c0_i32, %c0_i32_0 : i32, i32, i32
  }
  func.func @transform_2(%arg0: i32) -> (i32, i32) {
    %c0_i32 = arith.constant 0 : i32
    %c0_i32_0 = arith.constant 0 : i32
    %c0_i32_1 = arith.constant 0 : i32
    return %c0_i32, %c0_i32_0 : i32, i32
  }
  func.func @transform_3(%arg0: i32) -> (i32, i32) {
    %c0_i32 = arith.constant 0 : i32
    %c0_i32_0 = arith.constant 0 : i32
    %c0_i32_1 = arith.constant 0 : i32
    return %c0_i32, %c0_i32_0 : i32, i32
  }
  func.func @transform_4(%arg0: i32) -> (i32, i32) {
    %c0_i32 = arith.constant 0 : i32
    %c0_i32_0 = arith.constant 0 : i32
    %c0_i32_1 = arith.constant 0 : i32
    return %c0_i32, %c0_i32_0 : i32, i32
  }
  func.func @transform_5(%arg0: i32) -> (i32, i32) {
    %c0_i32 = arith.constant 0 : i32
    %c0_i32_0 = arith.constant 0 : i32
    %c0_i32_1 = arith.constant 0 : i32
    return %c0_i32, %c0_i32_0 : i32, i32
  }
  func.func @transform_6(%arg0: i32) -> (i32, i32, i32) {
    %c0_i32 = arith.constant 0 : i32
    %c0_i32_0 = arith.constant 0 : i32
    %c0_i32_1 = arith.constant 0 : i32
    %c0_i32_2 = arith.constant 0 : i32
    return %c0_i32, %c0_i32_0, %c0_i32_1 : i32, i32, i32
  }
  func.func @transform_7(%arg0: i32) -> i32 {
    %c0_i32 = arith.constant 0 : i32
    %c0_i32_0 = arith.constant 0 : i32
    return %c0_i32 : i32
  }
  func.func @transform_8(%arg0: i32) -> (i32, i32, i32) {
    %c0_i32 = arith.constant 0 : i32
    %c0_i32_0 = arith.constant 0 : i32
    %c0_i32_1 = arith.constant 0 : i32
    return %arg0, %c0_i32, %c0_i32_0 : i32, i32, i32
  }
}

</mosaic_0001>

<llo_original>
// kernel: tpu_custom_call.1
$region0: #{tpu_custom_call.1}
  #allocation0 [shape = 'u32[]', space=smem, size = 0x4, offset = 0x4, fixed_abs, tag = 'smem constant byte address 0x4 - core index']
  #allocation1 [shape = 'u32[144,128]{1,0:T(1,128)}', space=vmem, size = 0x12000, scoped, tag = 'internal scratch']
  #allocation2 [shape = 'f32[1]{0:T(128)S(6)}', space=smem, size = 0x200, scoped, tag = 'scoped memory for tpu_custom_call.1']
  %s0 = inlined_call_operand.hbm [shape: f32[2,32,256], index: 0, kind: input, shape index: {}]
  %s1 = inlined_call_operand.hbm [shape: f32[2,32,256], index: 1, kind: input, shape index: {}]
  %s2 = inlined_call_operand.vmem [shape: f32[4,32], index: 2, kind: input, shape index: {}]
  %s3 = inlined_call_operand.vmem [shape: f32[4,32], index: 3, kind: input, shape index: {}]
  %s4 = inlined_call_operand.vmem [shape: f32[32,4], index: 4, kind: input, shape index: {}]
  %s5 = inlined_call_operand.vmem [shape: f32[32,4], index: 5, kind: input, shape index: {}]
  %s6 = inlined_call_operand.hbm [shape: f32[2,256,256], index: 6, kind: input, shape index: {}]
  %s7 = inlined_call_operand.<no memory space> [shape: f32[1], index: 7, kind: input, shape index: {}]
  %s8 = inlined_call_operand.hbm [shape: f32[2,32,256], index: 8, kind: output, shape index: {}]
  %s9 = sld [smem:[#allocation0]]
  $region77: #{tpu_custom_call.1} parent=0
    _
  %s11 = ssub.s32 1, %s9
  %s12 = scalar_select 0, %s11, %s9
  %13 = sst [smem:[#allocation2]] %s7
  $region1: #{tpu_custom_call.1} parent=0
    #allocation3 [shape = 'u8[65536]{0}', space=vmem, size = 0x10000, scoped, tag = 'input window, operand 0']
    #allocation4 [shape = 's32[2]{0}', space=sflag, size = 0x8, scoped, tag = 'scoped memory for tpu_custom_call.1']
    #allocation5 [shape = 's32[2]{0}', space=sflag, size = 0x8, scoped, tag = 'scoped memory for tpu_custom_call.1']
    #allocation6 [shape = 'u8[65536]{0}', space=vmem, size = 0x10000, scoped, tag = 'input window, operand 1']
    #allocation7 [shape = 's32[2]{0}', space=sflag, size = 0x8, scoped, tag = 'scoped memory for tpu_custom_call.1']
    #allocation8 [shape = 'u8[524288]{0}', space=vmem, size = 0x80000, scoped, tag = 'input window, operand 6, single buffered']
    #allocation9 [shape = 'u8[65536]{0}', space=vmem, size = 0x10000, scoped, tag = 'output window, operand 0']
    %14 = vsyncpa [#allocation4], 0
    %s15 = scalar_lea.sflag [#allocation4], 1
    %16 = vsyncpa %s15, 0
    %17 = vsyncpa [#allocation7], 0
    %s18 = scalar_lea.sflag [#allocation7], 1
    %19 = vsyncpa %s18, 0
    %20 = vsyncpa [#allocation5], 0
    %s21 = scalar_lea.sflag [#allocation5], 1
    %22 = vsyncpa %s21, 0
    loop: start=0, step=1, limit=4
    $region2: #{tpu_custom_call.1} parent=1 // loop_pre_header
      _
    $region3: #{tpu_custom_call.1} parent=1 // loop_header
      %s24 = sphi 0, %s28
      %p25 = scmp.ge.s32.totalorder %s24, 4
      %s34 = sphi 0, %s36
      %s37 = sphi 0, %s34
      %s38 = sphi 0, %s37
      %s54 = sphi 0, %s38
      %s60 = sphi 0, %s62
      %s63 = sphi 0, %s60
      %s64 = sphi 0, %s63
      %s80 = sphi 0, %s64
      %s84 = sphi 0, %s84
      %s86 = sphi 0, %s84
      %s87 = sphi 0, %s86
      %s101 = sphi 0, %s87
      %s105 = sphi 0, %s105
      %s107 = sphi 0, %s105
      %s108 = sphi 0, %s107
      %s122 = sphi 0, %s108
      %s126 = sphi 0, %s126
      %s128 = sphi 0, %s126
      %s129 = sphi 0, %s128
      %s143 = sphi 0, %s129
      %s147 = sphi 0, %s147
      %s149 = sphi 0, %s147
      %s150 = sphi 0, %s149
      %s164 = sphi 0, %s150
      %s168 = sphi 0, %s168
      %s170 = sphi 0, %s168
      %s171 = sphi 0, %s170
      %s185 = sphi 0, %s171
      %s189 = sphi 0, %s189
      %s191 = sphi 0, %s189
      %s192 = sphi 0, %s191
      %s206 = sphi 0, %s192
      %s212 = sphi 0, %s214
      %s215 = sphi 0, %s212
      %s216 = sphi 0, %s215
      %s232 = sphi 0, %s216
    $region4: #{tpu_custom_call.1} parent=1 // loop_header_branch
      %27 = sbr.rel (%p25) target = $region8
    $region5: #{tpu_custom_call.1} parent=1 // loop_body
      %s29 = ssub.s32 %s24, 1
      %s30 = ssub.s32 %s24, 2
      %s31 = sadd.s32 %s24, 1
      %s32 = ssub.s32 %s24, %s31
      %p33 = scmp.eq.s32.totalorder %s32, 0
      %s35 = sadd.s32 %s34, 1
      %s36 = scalar_select %p33, %s34, %s35
      %p39 = pneg %p33
      %p40 = scmp.eq.s32.totalorder %s24, 1
      %p41 = por %p39, %p40
      %p42 = scmp.ne.s32.totalorder %s34, %s37
      %p43 = scmp.eq.s32.totalorder %s24, 0
      %p44 = por %p42, %p43
      %p45 = scmp.ne.s32.totalorder %s34, %s37
      %p46 = scmp.eq.s32.totalorder %s29, 1
      %p47 = por %p45, %p46
      %p48 = scmp.ne.s32.totalorder %s37, %s38
      %p49 = scmp.eq.s32.totalorder %s29, 0
      %p50 = por %p48, %p49
      %p51 = scmp.ne.s32.totalorder %s37, %s38
      %p52 = scmp.eq.s32.totalorder %s30, 1
      %p53 = por %p51, %p52
      %p55 = scmp.ne.s32.totalorder %s38, %s54
      %p56 = scmp.eq.s32.totalorder %s30, 0
      %p57 = por %p55, %p56
      %s58 = ssub.s32 %s24, %s31
      %p59 = scmp.eq.s32.totalorder %s58, 0
      %s61 = sadd.s32 %s60, 1
      %s62 = scalar_select %p59, %s60, %s61
      %p65 = pneg %p59
      %p66 = scmp.eq.s32.totalorder %s24, 1
      %p67 = por %p65, %p66
      %p68 = scmp.ne.s32.totalorder %s60, %s63
      %p69 = scmp.eq.s32.totalorder %s24, 0
      %p70 = por %p68, %p69
      %p71 = scmp.ne.s32.totalorder %s60, %s63
      %p72 = scmp.eq.s32.totalorder %s29, 1
      %p73 = por %p71, %p72
      %p74 = scmp.ne.s32.totalorder %s63, %s64
      %p75 = scmp.eq.s32.totalorder %s29, 0
      %p76 = por %p74, %p75
      %p77 = scmp.ne.s32.totalorder %s63, %s64
      %p78 = scmp.eq.s32.totalorder %s30, 1
      %p79 = por %p77, %p78
      %p81 = scmp.ne.s32.totalorder %s64, %s80
      %p82 = scmp.eq.s32.totalorder %s30, 0
      %p83 = por %p81, %p82
      %s85 = sadd.s32 %s84, 1
      %p88 = scmp.eq.s32.totalorder %s24, 1
      %p89 = scmp.ne.s32.totalorder %s84, %s86
      %p90 = scmp.eq.s32.totalorder %s24, 0
      %p91 = por %p89, %p90
      %p92 = scmp.ne.s32.totalorder %s84, %s86
      %p93 = scmp.eq.s32.totalorder %s29, 1
      %p94 = por %p92, %p93
      %p95 = scmp.ne.s32.totalorder %s86, %s87
      %p96 = scmp.eq.s32.totalorder %s29, 0
      %p97 = por %p95, %p96
      %p98 = scmp.ne.s32.totalorder %s86, %s87
      %p99 = scmp.eq.s32.totalorder %s30, 1
      %p100 = por %p98, %p99
      %p102 = scmp.ne.s32.totalorder %s87, %s101
      %p103 = scmp.eq.s32.totalorder %s30, 0
      %p104 = por %p102, %p103
      %s106 = sadd.s32 %s105, 1
      %p109 = scmp.eq.s32.totalorder %s24, 1
      %p110 = scmp.ne.s32.totalorder %s105, %s107
      %p111 = scmp.eq.s32.totalorder %s24, 0
      %p112 = por %p110, %p111
      %p113 = scmp.ne.s32.totalorder %s105, %s107
      %p114 = scmp.eq.s32.totalorder %s29, 1
      %p115 = por %p113, %p114
      %p116 = scmp.ne.s32.totalorder %s107, %s108
      %p117 = scmp.eq.s32.totalorder %s29, 0
      %p118 = por %p116, %p117
      %p119 = scmp.ne.s32.totalorder %s107, %s108
      %p120 = scmp.eq.s32.totalorder %s30, 1
      %p121 = por %p119, %p120
      %p123 = scmp.ne.s32.totalorder %s108, %s122
      %p124 = scmp.eq.s32.totalorder %s30, 0
      %p125 = por %p123, %p124
      %s127 = sadd.s32 %s126, 1
      %p130 = scmp.eq.s32.totalorder %s24, 1
      %p131 = scmp.ne.s32.totalorder %s126, %s128
      %p132 = scmp.eq.s32.totalorder %s24, 0
      %p133 = por %p131, %p132
      %p134 = scmp.ne.s32.totalorder %s126, %s128
      %p135 = scmp.eq.s32.totalorder %s29, 1
      %p136 = por %p134, %p135
      %p137 = scmp.ne.s32.totalorder %s128, %s129
      %p138 = scmp.eq.s32.totalorder %s29, 0
      %p139 = por %p137, %p138
      %p140 = scmp.ne.s32.totalorder %s128, %s129
      %p141 = scmp.eq.s32.totalorder %s30, 1
      %p142 = por %p140, %p141
      %p144 = scmp.ne.s32.totalorder %s129, %s143
      %p145 = scmp.eq.s32.totalorder %s30, 0
      %p146 = por %p144, %p145
      %s148 = sadd.s32 %s147, 1
      %p151 = scmp.eq.s32.totalorder %s24, 1
      %p152 = scmp.ne.s32.totalorder %s147, %s149
      %p153 = scmp.eq.s32.totalorder %s24, 0
      %p154 = por %p152, %p153
      %p155 = scmp.ne.s32.totalorder %s147, %s149
      %p156 = scmp.eq.s32.totalorder %s29, 1
      %p157 = por %p155, %p156
      %p158 = scmp.ne.s32.totalorder %s149, %s150
      %p159 = scmp.eq.s32.totalorder %s29, 0
      %p160 = por %p158, %p159
      %p161 = scmp.ne.s32.totalorder %s149, %s150
      %p162 = scmp.eq.s32.totalorder %s30, 1
      %p163 = por %p161, %p162
      %p165 = scmp.ne.s32.totalorder %s150, %s164
      %p166 = scmp.eq.s32.totalorder %s30, 0
      %p167 = por %p165, %p166
      %s169 = sadd.s32 %s168, 1
      %p172 = scmp.eq.s32.totalorder %s24, 1
      %p173 = scmp.ne.s32.totalorder %s168, %s170
      %p174 = scmp.eq.s32.totalorder %s24, 0
      %p175 = por %p173, %p174
      %p176 = scmp.ne.s32.totalorder %s168, %s170
      %p177 = scmp.eq.s32.totalorder %s29, 1
      %p178 = por %p176, %p177
      %p179 = scmp.ne.s32.totalorder %s170, %s171
      %p180 = scmp.eq.s32.totalorder %s29, 0
      %p181 = por %p179, %p180
      %p182 = scmp.ne.s32.totalorder %s170, %s171
      %p183 = scmp.eq.s32.totalorder %s30, 1
      %p184 = por %p182, %p183
      %p186 = scmp.ne.s32.totalorder %s171, %s185
      %p187 = scmp.eq.s32.totalorder %s30, 0
      %p188 = por %p186, %p187
      %s190 = sadd.s32 %s189, 1
      %p193 = scmp.eq.s32.totalorder %s24, 1
      %p194 = scmp.ne.s32.totalorder %s189, %s191
      %p195 = scmp.eq.s32.totalorder %s24, 0
      %p196 = por %p194, %p195
      %p197 = scmp.ne.s32.totalorder %s189, %s191
      %p198 = scmp.eq.s32.totalorder %s29, 1
      %p199 = por %p197, %p198
      %p200 = scmp.ne.s32.totalorder %s191, %s192
      %p201 = scmp.eq.s32.totalorder %s29, 0
      %p202 = por %p200, %p201
      %p203 = scmp.ne.s32.totalorder %s191, %s192
      %p204 = scmp.eq.s32.totalorder %s30, 1
      %p205 = por %p203, %p204
      %p207 = scmp.ne.s32.totalorder %s192, %s206
      %p208 = scmp.eq.s32.totalorder %s30, 0
      %p209 = por %p207, %p208
      %s210 = ssub.s32 %s24, %s31
      %p211 = scmp.eq.s32.totalorder %s210, 0
      %s213 = sadd.s32 %s212, 1
      %s214 = scalar_select %p211, %s212, %s213
      %p217 = pneg %p211
      %p218 = scmp.eq.s32.totalorder %s24, 1
      %p219 = por %p217, %p218
      %p220 = scmp.ne.s32.totalorder %s212, %s215
      %p221 = scmp.eq.s32.totalorder %s24, 0
      %p222 = por %p220, %p221
      %p223 = scmp.ne.s32.totalorder %s212, %s215
      %p224 = scmp.eq.s32.totalorder %s29, 1
      %p225 = por %p223, %p224
      %p226 = scmp.ne.s32.totalorder %s215, %s216
      %p227 = scmp.eq.s32.totalorder %s29, 0
      %p228 = por %p226, %p227
      %p229 = scmp.ne.s32.totalorder %s215, %s216
      %p230 = scmp.eq.s32.totalorder %s30, 1
      %p231 = por %p229, %p230
      %p233 = scmp.ne.s32.totalorder %s216, %s232
      %p234 = scmp.eq.s32.totalorder %s30, 0
      %p235 = por %p233, %p234
      %p236 = scmp.le.s32.totalorder 1, %s24
      %p237 = scmp.lt.s32.totalorder %s24, 3
      %p238 = pnand %p236, %p237
      %p239 = pneg %p238
      // Predicated region
      $region9: #{tpu_custom_call.1} parent=5 // pred_check
        _
      $region10: #{tpu_custom_call.1} parent=5 // pred_check_branch
        %241 = sbr.rel (%p238) target = $region12
      $region11: #{tpu_custom_call.1} parent=5 // pred_region
        %s242 = ssub.s32 %s24, 1
        // Predicated region
        $region13: #{tpu_custom_call.1} parent=11 // pred_check
          %p243 = pneg %p97
        $region14: #{tpu_custom_call.1} parent=11 // pred_check_branch
          %245 = sbr.rel (%p243) target = $region16
        $region15: #{tpu_custom_call.1} parent=11 // pred_region
          _
        $region16: #{tpu_custom_call.1} parent=11 // pred_fallthru
          _
        // Predicated region
        $region17: #{tpu_custom_call.1} parent=11 // pred_check
          %p246 = pneg %p118
        $region18: #{tpu_custom_call.1} parent=11 // pred_check_branch
          %248 = sbr.rel (%p246) target = $region20
        $region19: #{tpu_custom_call.1} parent=11 // pred_region
          _
        $region20: #{tpu_custom_call.1} parent=11 // pred_fallthru
          _
        // Predicated region
        $region21: #{tpu_custom_call.1} parent=11 // pred_check
          %p249 = pneg %p139
        $region22: #{tpu_custom_call.1} parent=11 // pred_check_branch
          %251 = sbr.rel (%p249) target = $region24
        $region23: #{tpu_custom_call.1} parent=11 // pred_region
          _
        $region24: #{tpu_custom_call.1} parent=11 // pred_fallthru
          _
        // Predicated region
        $region25: #{tpu_custom_call.1} parent=11 // pred_check
          %p252 = pneg %p160
        $region26: #{tpu_custom_call.1} parent=11 // pred_check_branch
          %254 = sbr.rel (%p252) target = $region28
        $region27: #{tpu_custom_call.1} parent=11 // pred_region
          _
        $region28: #{tpu_custom_call.1} parent=11 // pred_fallthru
          _
        // Predicated region
        $region29: #{tpu_custom_call.1} parent=11 // pred_check
          %p255 = pneg %p181
        $region30: #{tpu_custom_call.1} parent=11 // pred_check_branch
          %257 = sbr.rel (%p255) target = $region32
        $region31: #{tpu_custom_call.1} parent=11 // pred_region
          %s259 = ssub.s32 16384, 16384
          %260 = vsyncadd [#allocation7], %s259
          %s261 = sshll.u32 [#allocation8], 4
          %s262 = int_to_ptr.vmem [resolvable:$true] %s261
          %267 = dma.hbm_to_vmem [thread:$0]  %s6, 16384, %s262, [#allocation7], 256, 256, 16
        $region32: #{tpu_custom_call.1} parent=11 // pred_fallthru
          _
        // Predicated region
        $region33: #{tpu_custom_call.1} parent=11 // pred_check
          %p268 = pneg %p202
        $region34: #{tpu_custom_call.1} parent=11 // pred_check_branch
          %270 = sbr.rel (%p268) target = $region36
        $region35: #{tpu_custom_call.1} parent=11 // pred_region
          _
        $region36: #{tpu_custom_call.1} parent=11 // pred_fallthru
          _
      $region12: #{tpu_custom_call.1} parent=5 // pred_fallthru
        _
      %p271 = scmp.lt.s32.totalorder %s24, 2
      // Predicated region
      $region37: #{tpu_custom_call.1} parent=5 // pred_check
        %p272 = pneg %p271
      $region38: #{tpu_custom_call.1} parent=5 // pred_check_branch
        %274 = sbr.rel (%p272) target = $region40
      $region39: #{tpu_custom_call.1} parent=5 // pred_region
        // Predicated region
        $region41: #{tpu_custom_call.1} parent=39 // pred_check
          %p275 = pneg %p44
        $region42: #{tpu_custom_call.1} parent=39 // pred_check_branch
          %277 = sbr.rel (%p275) target = $region44
        $region43: #{tpu_custom_call.1} parent=39 // pred_region
          %s278 = sand.u32 %s34, 1
          %s279 = scalar_lea.sflag [#allocation4], %s278
          %s280 = sand.u32 %s34, 1
          %s281 = smul.addr %s280, 64
          %s282 = scalar_lea.vmem [#allocation3], %s281
          %s284 = ssub.s32 1024, 1024
          %285 = vsyncadd %s279, %s284
          %s286 = smul.addr %s24, 8
          %s287 = smul.addr %s286, 128
          %s288 = scalar_lea.hbm %s0, %s287
          %s289 = sshll.u32 %s282, 4
          %s290 = int_to_ptr.vmem [resolvable:$true] %s289
          %295 = dma.hbm_to_vmem [thread:$0]  %s288, 1024, %s290, %s279, 256, 256, 16
        $region44: #{tpu_custom_call.1} parent=39 // pred_fallthru
          _
        // Predicated region
        $region45: #{tpu_custom_call.1} parent=39 // pred_check
          %p296 = pneg %p70
        $region46: #{tpu_custom_call.1} parent=39 // pred_check_branch
          %298 = sbr.rel (%p296) target = $region48
        $region47: #{tpu_custom_call.1} parent=39 // pred_region
          %s299 = sand.u32 %s24, 1
          %s300 = scalar_lea.sflag [#allocation7], %s299
          %s301 = sand.u32 %s60, 1
          %s302 = smul.addr %s301, 64
          %s303 = scalar_lea.vmem [#allocation6], %s302
          %s305 = ssub.s32 1024, 1024
          %306 = vsyncadd %s300, %s305
          %s307 = smul.addr %s24, 8
          %s308 = smul.addr %s307, 128
          %s309 = scalar_lea.hbm %s1, %s308
          %s310 = sshll.u32 %s303, 4
          %s311 = int_to_ptr.vmem [resolvable:$true] %s310
          %316 = dma.hbm_to_vmem [thread:$0]  %s309, 1024, %s311, %s300, 256, 256, 16
        $region48: #{tpu_custom_call.1} parent=39 // pred_fallthru
          _
      $region40: #{tpu_custom_call.1} parent=5 // pred_fallthru
        _
      %p317 = scmp.le.s32.totalorder 1, %s24
      %p318 = scmp.lt.s32.totalorder %s24, 3
      %p319 = pnand %p317, %p318
      %p320 = pneg %p319
      // Predicated region
      $region49: #{tpu_custom_call.1} parent=5 // pred_check
        _
      $region50: #{tpu_custom_call.1} parent=5 // pred_check_branch
        %322 = sbr.rel (%p319) target = $region52
      $region51: #{tpu_custom_call.1} parent=5 // pred_region
        %s323 = ssub.s32 %s24, 1
        %s324 = sand.u32 %s37, 1
        %s325 = scalar_lea.sflag [#allocation4], %s324
        %s326 = sand.u32 %s37, 1
        %s327 = smul.addr %s326, 64
        %s328 = scalar_lea.vmem [#allocation3], %s327
        // Predicated region
        $region53: #{tpu_custom_call.1} parent=51 // pred_check
          %p329 = pneg %p50
        $region54: #{tpu_custom_call.1} parent=51 // pred_check_branch
          %331 = sbr.rel (%p329) target = $region56
        $region55: #{tpu_custom_call.1} parent=51 // pred_region
          %332 = dma.done %s325, 1024
        $region56: #{tpu_custom_call.1} parent=51 // pred_fallthru
          _
        %s333 = sand.u32 %s29, 1
        %s334 = scalar_lea.sflag [#allocation7], %s333
        %s335 = sand.u32 %s63, 1
        %s336 = smul.addr %s335, 64
        %s337 = scalar_lea.vmem [#allocation6], %s336
        // Predicated region
        $region57: #{tpu_custom_call.1} parent=51 // pred_check
          %p338 = pneg %p76
        $region58: #{tpu_custom_call.1} parent=51 // pred_check_branch
          %340 = sbr.rel (%p338) target = $region60
        $region59: #{tpu_custom_call.1} parent=51 // pred_region
          %341 = dma.done %s334, 1024
        $region60: #{tpu_custom_call.1} parent=51 // pred_fallthru
          _
        // Predicated region
        $region61: #{tpu_custom_call.1} parent=51 // pred_check
          %p342 = pneg %p181
        $region62: #{tpu_custom_call.1} parent=51 // pred_check_branch
          %344 = sbr.rel (%p342) target = $region64
        $region63: #{tpu_custom_call.1} parent=51 // pred_region
          %345 = dma.done [#allocation7], 16384
        $region64: #{tpu_custom_call.1} parent=51 // pred_fallthru
          _
        %s346 = sand.u32 %s37, 1
        %s347 = scalar_lea.sflag [#allocation4], %s346
        %s348 = sand.u32 %s37, 1
        %s349 = smul.addr %s348, 64
        %s350 = scalar_lea.vmem [#allocation3], %s349
        %p351 = pneg %p50
        %p352 = pneg %p47
        %s353 = sand.u32 %s29, 1
        %s354 = scalar_lea.sflag [#allocation7], %s353
        %s355 = sand.u32 %s63, 1
        %s356 = smul.addr %s355, 64
        %s357 = scalar_lea.vmem [#allocation6], %s356
        %p358 = pneg %p76
        %p359 = pneg %p73
        %p360 = pneg %p97
        %p361 = pneg %p94
        %p362 = pneg %p118
        %p363 = pneg %p115
        %p364 = pneg %p139
        %p365 = pneg %p136
        %p366 = pneg %p160
        %p367 = pneg %p157
        %p368 = pneg %p181
        %p369 = pneg %p178
        %p370 = pneg %p202
        %p371 = pneg %p199
        %p372 = pneg %p228
        %p373 = pneg %p225
        %s374 = sand.u32 %s215, 1
        %s375 = scalar_lea.sflag [#allocation5], %s374
        %s376 = sand.u32 %s215, 1
        %s377 = smul.addr %s376, 64
        %s378 = scalar_lea.vmem [#allocation9], %s377
        %s379 = sld [smem:[#allocation2]]
        %v380 = vld [vmem:[%s328] sm:$0xff]
        %v381 = vld [vmem:[%s328 + $0x8] sm:$0xff]
        %v382 = vld [vmem:[%s328 + $0x10] sm:$0xff]
        %v383 = vld [vmem:[%s328 + $0x18] sm:$0xff]
        %v384 = vld [vmem:[%s328 + $0x20] sm:$0xff]
        %v385 = vld [vmem:[%s328 + $0x28] sm:$0xff]
        %v386 = vld [vmem:[%s328 + $0x30] sm:$0xff]
        %v387 = vld [vmem:[%s328 + $0x38] sm:$0xff]
        %v388 = vld [vmem:[%s337] sm:$0xff]
        %v389 = vld [vmem:[%s337 + $0x8] sm:$0xff]
        %v390 = vld [vmem:[%s337 + $0x10] sm:$0xff]
        %v391 = vld [vmem:[%s337 + $0x18] sm:$0xff]
        %v392 = vld [vmem:[%s337 + $0x20] sm:$0xff]
        %v393 = vld [vmem:[%s337 + $0x28] sm:$0xff]
        %v394 = vld [vmem:[%s337 + $0x30] sm:$0xff]
        %v395 = vld [vmem:[%s337 + $0x38] sm:$0xff]
        %v396 = vadd.f32 %v380, %v381
        %397 = vadd.xlane.f32.xlu0 %v396
        %v398 = vpop.xlane.xlu0 %397
        %v399 = vadd.f32 %v382, %v383
        %400 = vadd.xlane.f32.xlu0 %v399
        %v401 = vpop.xlane.xlu0 %400
        %v402 = vadd.f32 %v384, %v385
        %403 = vadd.xlane.f32.xlu0 %v402
        %v404 = vpop.xlane.xlu0 %403
        %v405 = vadd.f32 %v386, %v387
        %406 = vadd.xlane.f32.xlu0 %v405
        %v407 = vpop.xlane.xlu0 %406
        %v408 = vrcp.pop 256.0
        %v409 = vmul.f32 %v398, %v408
        %v410 = vmul.f32 %v401, %v408
        %v411 = vmul.f32 %v404, %v408
        %v412 = vmul.f32 %v407, %v408
        %v413 = vmax.f32 %v380, %v381
        %414 = vmax.xlane.f32.xlu0 %v413
        %v415 = vpop.xlane.xlu0 %414
        %v416 = vmax.f32 %v382, %v383
        %417 = vmax.xlane.f32.xlu0 %v416
        %v418 = vpop.xlane.xlu0 %417
        %v419 = vmax.f32 %v384, %v385
        %420 = vmax.xlane.f32.xlu0 %v419
        %v421 = vpop.xlane.xlu0 %420
        %v422 = vmax.f32 %v386, %v387
        %423 = vmax.xlane.f32.xlu0 %v422
        %v424 = vpop.xlane.xlu0 %423
        %v425 = vadd.f32 %v388, %v389
        %426 = vadd.xlane.f32.xlu0 %v425
        %v427 = vpop.xlane.xlu0 %426
        %v428 = vadd.f32 %v390, %v391
        %429 = vadd.xlane.f32.xlu0 %v428
        %v430 = vpop.xlane.xlu0 %429
        %v431 = vadd.f32 %v392, %v393
        %432 = vadd.xlane.f32.xlu0 %v431
        %v433 = vpop.xlane.xlu0 %432
        %v434 = vadd.f32 %v394, %v395
        %435 = vadd.xlane.f32.xlu0 %v434
        %v436 = vpop.xlane.xlu0 %435
        %v437 = vmul.f32 %v427, %v408
        %v438 = vmul.f32 %v430, %v408
        %v439 = vmul.f32 %v433, %v408
        %v440 = vmul.f32 %v436, %v408
        %v441 = vmax.f32 %v388, %v389
        %442 = vmax.xlane.f32.xlu0 %v441
        %v443 = vpop.xlane.xlu0 %442
        %v444 = vmax.f32 %v390, %v391
        %445 = vmax.xlane.f32.xlu0 %v444
        %v446 = vpop.xlane.xlu0 %445
        %v447 = vmax.f32 %v392, %v393
        %448 = vmax.xlane.f32.xlu0 %v447
        %v449 = vpop.xlane.xlu0 %448
        %v450 = vmax.f32 %v394, %v395
        %451 = vmax.xlane.f32.xlu0 %v450
        %v452 = vpop.xlane.xlu0 %451
        %v453 = vlaneseq
        %v454 = vand.u32 %v453, 127
        %vm455 = vcmp.eq.s32.totalorder %v454, 0
        %v456 = vsel %vm455, %v409, %v415
        %v457 = vsel %vm455, %v410, %v418
        %v458 = vsel %vm455, %v411, %v421
        %v459 = vsel %vm455, %v412, %v424
        %v460 = vsel %vm455, %v437, %v443
        %v461 = vsel %vm455, %v438, %v446
        %v462 = vsel %vm455, %v439, %v449
        %v463 = vsel %vm455, %v440, %v452
        %v464 = vld [vmem:[%s2] sm:$0xf]
        %v465 = vld [vmem:[%s3] sm:$0xf]
        %vm466 = vcmask 261120
        %v468 = vsel %vm466, %v465, 0
        %470 = vmatprep.subr.mxu0 0.0
        %471 = vmatpush1.msra.mxu0 0.0
        %472 = vmatprep.subr.mxu0 0.0
        %473 = vmatpush1.msra.mxu0 0.0
        %474 = vmatprep.subr.mxu0 0.0
        %475 = vmatpush1.msra.mxu0 0.0
        %476 = vmatprep.subr.mxu0 0.0
        %477 = vmatpush1.msra.mxu0 0.0
        %478 = vmatprep.subr.mxu0 0.0
        %479 = vmatpush1.msra.mxu0 0.0
        %480 = vmatprep.subr.mxu0 0.0
        %481 = vmatpush1.msra.mxu0 0.0
        %482 = vmatprep.subr.mxu0 0.0
        %483 = vmatpush1.msra.mxu0 0.0
        %484 = vmatprep.subr.mxu0 0.0
        %485 = vmatpush1.msra.mxu0 0.0
        %486 = vmatprep.subr.mxu0 0.0
        %487 = vmatpush1.msra.mxu0 0.0
        %488 = vmatprep.subr.mxu0 0.0
        %489 = vmatpush1.msra.mxu0 0.0
        %490 = vmatprep.subr.mxu0 0.0
        %491 = vmatpush1.msra.mxu0 0.0
        %492 = vmatprep.subr.mxu0 0.0
        %493 = vmatpush1.msra.mxu0 0.0
        %494 = vmatprep.subr.mxu0 0.0
        %495 = vmatpush1.msra.mxu0 %v463
        %496 = vmatprep.subr.mxu0 0.0
        %497 = vmatpush1.msra.mxu0 %v462
        %498 = vmatprep.subr.mxu0 0.0
        %499 = vmatpush1.msra.mxu0 %v461
        %500 = vmatprep.subr.mxu0 0.0
        %501 = vmatpush1.msra.mxu0 %v460
        %502 = vmatprep.subr.mxu0 0.0
        %503 = vmatpush2.msra.mxu0 0.0
        %504 = vmatprep.subr.mxu0 0.0
        %505 = vmatpush2.msra.mxu0 0.0
        %506 = vmatprep.subr.mxu0 0.0
        %507 = vmatpush2.msra.mxu0 0.0
        %508 = vmatprep.subr.mxu0 0.0
        %509 = vmatpush2.msra.mxu0 0.0
        %510 = vmatprep.subr.mxu0 0.0
        %511 = vmatpush2.msra.mxu0 0.0
        %512 = vmatprep.subr.mxu0 0.0
        %513 = vmatpush2.msra.mxu0 0.0
        %514 = vmatprep.subr.mxu0 0.0
        %515 = vmatpush2.msra.mxu0 0.0
        %516 = vmatprep.subr.mxu0 0.0
        %517 = vmatpush2.msra.mxu0 0.0
        %518 = vmatprep.subr.mxu0 0.0
        %519 = vmatpush2.msra.mxu0 0.0
        %520 = vmatprep.subr.mxu0 0.0
        %521 = vmatpush2.msra.mxu0 0.0
        %522 = vmatprep.subr.mxu0 0.0
        %523 = vmatpush2.msra.mxu0 0.0
        %524 = vmatprep.subr.mxu0 0.0
        %525 = vmatpush2.msra.mxu0 0.0
        %526 = vmatprep.subr.mxu0 0.0
        %527 = vmatpush2.msra.mxu0 0.0
        %528 = vmatprep.subr.mxu0 0.0
        %529 = vmatpush2.msra.mxu0 0.0
        %530 = vmatprep.subr.mxu0 0.0
        %531 = vmatpush2.msra.mxu0 0.0
        %532 = vmatprep.subr.mxu0 0.0
        %533 = vmatpush2.msra.mxu0 0.0
        %534 = vmatprep.mubr.f32.mxu0 0.0
        %535 = vmatmul.mubr.f32.gmra.mxu0 %v468
        %v536 = vpop.f32.mrf.mxu0
        %v537 = vadd.f32 0.0, %v536
        %v538 = vpop.f32.mrf.mxu0
        %539 = vdwg.mxu0
        %v541 = vsel %vm466, %v464, 0
        %543 = vmatprep.subr.mxu0 0.0
        %544 = vmatpush1.msra.mxu0 0.0
        %545 = vmatprep.subr.mxu0 0.0
        %546 = vmatpush1.msra.mxu0 0.0
        %547 = vmatprep.subr.mxu0 0.0
        %548 = vmatpush1.msra.mxu0 0.0
        %549 = vmatprep.subr.mxu0 0.0
        %550 = vmatpush1.msra.mxu0 0.0
        %551 = vmatprep.subr.mxu0 0.0
        %552 = vmatpush1.msra.mxu0 0.0
        %553 = vmatprep.subr.mxu0 0.0
        %554 = vmatpush1.msra.mxu0 0.0
        %555 = vmatprep.subr.mxu0 0.0
        %556 = vmatpush1.msra.mxu0 0.0
        %557 = vmatprep.subr.mxu0 0.0
        %558 = vmatpush1.msra.mxu0 0.0
        %559 = vmatprep.subr.mxu0 0.0
        %560 = vmatpush1.msra.mxu0 0.0
        %561 = vmatprep.subr.mxu0 0.0
        %562 = vmatpush1.msra.mxu0 0.0
        %563 = vmatprep.subr.mxu0 0.0
        %564 = vmatpush1.msra.mxu0 0.0
        %565 = vmatprep.subr.mxu0 0.0
        %566 = vmatpush1.msra.mxu0 0.0
        %567 = vmatprep.subr.mxu0 0.0
        %568 = vmatpush1.msra.mxu0 %v459
        %569 = vmatprep.subr.mxu0 0.0
        %570 = vmatpush1.msra.mxu0 %v458
        %571 = vmatprep.subr.mxu0 0.0
        %572 = vmatpush1.msra.mxu0 %v457
        %573 = vmatprep.subr.mxu0 0.0
        %574 = vmatpush1.msra.mxu0 %v456
        %575 = vmatprep.subr.mxu0 0.0
        %576 = vmatpush2.msra.mxu0 0.0
        %577 = vmatprep.subr.mxu0 0.0
        %578 = vmatpush2.msra.mxu0 0.0
        %579 = vmatprep.subr.mxu0 0.0
        %580 = vmatpush2.msra.mxu0 0.0
        %581 = vmatprep.subr.mxu0 0.0
        %582 = vmatpush2.msra.mxu0 0.0
        %583 = vmatprep.subr.mxu0 0.0
        %584 = vmatpush2.msra.mxu0 0.0
        %585 = vmatprep.subr.mxu0 0.0
        %586 = vmatpush2.msra.mxu0 0.0
        %587 = vmatprep.subr.mxu0 0.0
        %588 = vmatpush2.msra.mxu0 0.0
        %589 = vmatprep.subr.mxu0 0.0
        %590 = vmatpush2.msra.mxu0 0.0
        %591 = vmatprep.subr.mxu0 0.0
        %592 = vmatpush2.msra.mxu0 0.0
        %593 = vmatprep.subr.mxu0 0.0
        %594 = vmatpush2.msra.mxu0 0.0
        %595 = vmatprep.subr.mxu0 0.0
        %596 = vmatpush2.msra.mxu0 0.0
        %597 = vmatprep.subr.mxu0 0.0
        %598 = vmatpush2.msra.mxu0 0.0
        %599 = vmatprep.subr.mxu0 0.0
        %600 = vmatpush2.msra.mxu0 0.0
        %601 = vmatprep.subr.mxu0 0.0
        %602 = vmatpush2.msra.mxu0 0.0
        %603 = vmatprep.subr.mxu0 0.0
        %604 = vmatpush2.msra.mxu0 0.0
        %605 = vmatprep.subr.mxu0 0.0
        %606 = vmatpush2.msra.mxu0 0.0
        %607 = vmatprep.mubr.f32.mxu0 0.0
        %608 = vmatmul.mubr.f32.gmra.mxu0 %v541
        %v609 = vpop.f32.mrf.mxu0
        %v610 = vadd.f32 %v537, %v609
        %v611 = vpop.f32.mrf.mxu0
        %612 = vdwg.mxu0
        %v613 = vmax.f32 %v610, 0.0
        %v614 = vld [vmem:[%s4] sm:$0xff]
        %v615 = vld [vmem:[%s4 + $0x8] sm:$0xff]
        %v616 = vld [vmem:[%s4 + $0x10] sm:$0xff]
        %v617 = vld [vmem:[%s4 + $0x18] sm:$0xff]
        %vm618 = vcmask 31744
        %v620 = vsel %vm618, %v614, 0
        %v623 = vsel %vm618, %v615, 0
        %v626 = vsel %vm618, %v616, 0
        %v629 = vsel %vm618, %v617, 0
        %vm631 = vcmask 1043456
        %v633 = vsel %vm631, %v613, 0
        %635 = vmatprep.subr.mxu0 0.0
        %636 = vmatpush1.msra.mxu0 0.0
        %637 = vmatprep.subr.mxu0 0.0
        %638 = vmatpush1.msra.mxu0 0.0
        %639 = vmatprep.subr.mxu0 0.0
        %640 = vmatpush1.msra.mxu0 0.0
        %641 = vmatprep.subr.mxu0 0.0
        %642 = vmatpush1.msra.mxu0 0.0
        %643 = vmatprep.subr.mxu0 0.0
        %644 = vmatpush1.msra.mxu0 0.0
        %645 = vmatprep.subr.mxu0 0.0
        %646 = vmatpush1.msra.mxu0 0.0
        %647 = vmatprep.subr.mxu0 0.0
        %648 = vmatpush1.msra.mxu0 0.0
        %649 = vmatprep.subr.mxu0 0.0
        %650 = vmatpush1.msra.mxu0 0.0
        %651 = vmatprep.subr.mxu0 0.0
        %652 = vmatpush1.msra.mxu0 0.0
        %653 = vmatprep.subr.mxu0 0.0
        %654 = vmatpush1.msra.mxu0 0.0
        %655 = vmatprep.subr.mxu0 0.0
        %656 = vmatpush1.msra.mxu0 0.0
        %657 = vmatprep.subr.mxu0 0.0
        %658 = vmatpush1.msra.mxu0 0.0
        %659 = vmatprep.subr.mxu0 0.0
        %660 = vmatpush1.msra.mxu0 0.0
        %661 = vmatprep.subr.mxu0 0.0
        %662 = vmatpush1.msra.mxu0 0.0
        %663 = vmatprep.subr.mxu0 0.0
        %664 = vmatpush1.msra.mxu0 0.0
        %665 = vmatprep.subr.mxu0 0.0
        %666 = vmatpush1.msra.mxu0 %v633
        %667 = vmatprep.subr.mxu0 0.0
        %668 = vmatpush2.msra.mxu0 0.0
        %669 = vmatprep.subr.mxu0 0.0
        %670 = vmatpush2.msra.mxu0 0.0
        %671 = vmatprep.subr.mxu0 0.0
        %672 = vmatpush2.msra.mxu0 0.0
        %673 = vmatprep.subr.mxu0 0.0
        %674 = vmatpush2.msra.mxu0 0.0
        %675 = vmatprep.subr.mxu0 0.0
        %676 = vmatpush2.msra.mxu0 0.0
        %677 = vmatprep.subr.mxu0 0.0
        %678 = vmatpush2.msra.mxu0 0.0
        %679 = vmatprep.subr.mxu0 0.0
        %680 = vmatpush2.msra.mxu0 0.0
        %681 = vmatprep.subr.mxu0 0.0
        %682 = vmatpush2.msra.mxu0 0.0
        %683 = vmatprep.subr.mxu0 0.0
        %684 = vmatpush2.msra.mxu0 0.0
        %685 = vmatprep.subr.mxu0 0.0
        %686 = vmatpush2.msra.mxu0 0.0
        %687 = vmatprep.subr.mxu0 0.0
        %688 = vmatpush2.msra.mxu0 0.0
        %689 = vmatprep.subr.mxu0 0.0
        %690 = vmatpush2.msra.mxu0 0.0
        %691 = vmatprep.subr.mxu0 0.0
        %692 = vmatpush2.msra.mxu0 0.0
        %693 = vmatprep.subr.mxu0 0.0
        %694 = vmatpush2.msra.mxu0 0.0
        %695 = vmatprep.subr.mxu0 0.0
        %696 = vmatpush2.msra.mxu0 0.0
        %697 = vmatprep.subr.mxu0 0.0
        %698 = vmatpush2.msra.mxu0 0.0
        %699 = vmatprep.mubr.f32.mxu0 0.0
        %700 = vmatmul.mubr.f32.gmra.mxu0 %v620
        %v701 = vpop.f32.mrf.mxu0
        %v702 = vadd.f32 0.0, %v701
        %v703 = vpop.f32.mrf.mxu0
        %704 = vmatprep.mubr.f32.mxu0 0.0
        %705 = vmatmul.mubr.f32.gmra.mxu0 %v623
        %v706 = vpop.f32.mrf.mxu0
        %v707 = vadd.f32 0.0, %v706
        %v708 = vpop.f32.mrf.mxu0
        %709 = vmatprep.mubr.f32.mxu0 0.0
        %710 = vmatmul.mubr.f32.gmra.mxu0 %v626
        %v711 = vpop.f32.mrf.mxu0
        %v712 = vadd.f32 0.0, %v711
        %v713 = vpop.f32.mrf.mxu0
        %714 = vmatprep.mubr.f32.mxu0 0.0
        %715 = vmatmul.mubr.f32.gmra.mxu0 %v629
        %v716 = vpop.f32.mrf.mxu0
        %v717 = vadd.f32 0.0, %v716
        %v718 = vpop.f32.mrf.mxu0
        %719 = vdwg.mxu0
        %v720 = vld [vmem:[%s5] sm:$0xff]
        %v721 = vld [vmem:[%s5 + $0x8] sm:$0xff]
        %v722 = vld [vmem:[%s5 + $0x10] sm:$0xff]
        %v723 = vld [vmem:[%s5 + $0x18] sm:$0xff]
        %v725 = vsel %vm618, %v720, 0
        %v728 = vsel %vm618, %v721, 0
        %v731 = vsel %vm618, %v722, 0
        %v734 = vsel %vm618, %v723, 0
        %736 = vmatprep.subr.mxu0 0.0
        %737 = vmatpush1.msra.mxu0 0.0
        %738 = vmatprep.subr.mxu0 0.0
        %739 = vmatpush1.msra.mxu0 0.0
        %740 = vmatprep.subr.mxu0 0.0
        %741 = vmatpush1.msra.mxu0 0.0
        %742 = vmatprep.subr.mxu0 0.0
        %743 = vmatpush1.msra.mxu0 0.0
        %744 = vmatprep.subr.mxu0 0.0
        %745 = vmatpush1.msra.mxu0 0.0
        %746 = vmatprep.subr.mxu0 0.0
        %747 = vmatpush1.msra.mxu0 0.0
        %748 = vmatprep.subr.mxu0 0.0
        %749 = vmatpush1.msra.mxu0 0.0
        %750 = vmatprep.subr.mxu0 0.0
        %751 = vmatpush1.msra.mxu0 0.0
        %752 = vmatprep.subr.mxu0 0.0
        %753 = vmatpush1.msra.mxu0 0.0
        %754 = vmatprep.subr.mxu0 0.0
        %755 = vmatpush1.msra.mxu0 0.0
        %756 = vmatprep.subr.mxu0 0.0
        %757 = vmatpush1.msra.mxu0 0.0
        %758 = vmatprep.subr.mxu0 0.0
        %759 = vmatpush1.msra.mxu0 0.0
        %760 = vmatprep.subr.mxu0 0.0
        %761 = vmatpush1.msra.mxu0 0.0
        %762 = vmatprep.subr.mxu0 0.0
        %763 = vmatpush1.msra.mxu0 0.0
        %764 = vmatprep.subr.mxu0 0.0
        %765 = vmatpush1.msra.mxu0 0.0
        %766 = vmatprep.subr.mxu0 0.0
        %767 = vmatpush1.msra.mxu0 %v633
        %768 = vmatprep.subr.mxu0 0.0
        %769 = vmatpush2.msra.mxu0 0.0
        %770 = vmatprep.subr.mxu0 0.0
        %771 = vmatpush2.msra.mxu0 0.0
        %772 = vmatprep.subr.mxu0 0.0
        %773 = vmatpush2.msra.mxu0 0.0
        %774 = vmatprep.subr.mxu0 0.0
        %775 = vmatpush2.msra.mxu0 0.0
        %776 = vmatprep.subr.mxu0 0.0
        %777 = vmatpush2.msra.mxu0 0.0
        %778 = vmatprep.subr.mxu0 0.0
        %779 = vmatpush2.msra.mxu0 0.0
        %780 = vmatprep.subr.mxu0 0.0
        %781 = vmatpush2.msra.mxu0 0.0
        %782 = vmatprep.subr.mxu0 0.0
        %783 = vmatpush2.msra.mxu0 0.0
        %784 = vmatprep.subr.mxu0 0.0
        %785 = vmatpush2.msra.mxu0 0.0
        %786 = vmatprep.subr.mxu0 0.0
        %787 = vmatpush2.msra.mxu0 0.0
        %788 = vmatprep.subr.mxu0 0.0
        %789 = vmatpush2.msra.mxu0 0.0
        %790 = vmatprep.subr.mxu0 0.0
        %791 = vmatpush2.msra.mxu0 0.0
        %792 = vmatprep.subr.mxu0 0.0
        %793 = vmatpush2.msra.mxu0 0.0
        %794 = vmatprep.subr.mxu0 0.0
        %795 = vmatpush2.msra.mxu0 0.0
        %796 = vmatprep.subr.mxu0 0.0
        %797 = vmatpush2.msra.mxu0 0.0
        %798 = vmatprep.subr.mxu0 0.0
        %799 = vmatpush2.msra.mxu0 0.0
        %800 = vmatprep.mubr.f32.mxu0 0.0
        %801 = vmatmul.mubr.f32.gmra.mxu0 %v725
        %v802 = vpop.f32.mrf.mxu0
        %v803 = vadd.f32 0.0, %v802
        %v804 = vpop.f32.mrf.mxu0
        %805 = vmatprep.mubr.f32.mxu0 0.0
        %806 = vmatmul.mubr.f32.gmra.mxu0 %v728
        %v807 = vpop.f32.mrf.mxu0
        %v808 = vadd.f32 0.0, %v807
        %v809 = vpop.f32.mrf.mxu0
        %810 = vmatprep.mubr.f32.mxu0 0.0
        %811 = vmatmul.mubr.f32.gmra.mxu0 %v731
        %v812 = vpop.f32.mrf.mxu0
        %v813 = vadd.f32 0.0, %v812
        %v814 = vpop.f32.mrf.mxu0
        %815 = vmatprep.mubr.f32.mxu0 0.0
        %816 = vmatmul.mubr.f32.gmra.mxu0 %v734
        %v817 = vpop.f32.mrf.mxu0
        %v818 = vadd.f32 0.0, %v817
        %v819 = vpop.f32.mrf.mxu0
        %820 = vdwg.mxu0
        %vm821 = vcmask 15360
        %v822 = vsel %vm821, %v702, 0.0
        %823 = vadd.xlane.f32.xlu0 %v822
        %v824 = vpop.xlane.xlu0 %823
        %v825 = vsel %vm821, %v707, 0.0
        %826 = vadd.xlane.f32.xlu0 %v825
        %v827 = vpop.xlane.xlu0 %826
        %v828 = vsel %vm821, %v712, 0.0
        %829 = vadd.xlane.f32.xlu0 %v828
        %v830 = vpop.xlane.xlu0 %829
        %v831 = vsel %vm821, %v717, 0.0
        %832 = vadd.xlane.f32.xlu0 %v831
        %v833 = vpop.xlane.xlu0 %832
        %v834 = vxor.u32 %v824, 2147483648
        %v835 = vxor.u32 %v827, 2147483648
        %v836 = vxor.u32 %v830, 2147483648
        %v837 = vxor.u32 %v833, 2147483648
        %v838 = vmul.f32 %v834, 1.442695
        %v839 = vpow.pop %v838
        %v840 = vmul.f32 %v835, 1.442695
        %v841 = vpow.pop %v840
        %v842 = vmul.f32 %v836, 1.442695
        %v843 = vpow.pop %v842
        %v844 = vmul.f32 %v837, 1.442695
        %v845 = vpow.pop %v844
        %v846 = vadd.f32 %v839, 1.0
        %v847 = vadd.f32 %v841, 1.0
        %v848 = vadd.f32 %v843, 1.0
        %v849 = vadd.f32 %v845, 1.0
        %v850 = vrcp.pop %v846
        %v851 = vmul.f32 1.0, %v850
        %v852 = vrcp.pop %v847
        %v853 = vmul.f32 1.0, %v852
        %v854 = vrcp.pop %v848
        %v855 = vmul.f32 1.0, %v854
        %v856 = vrcp.pop %v849
        %v857 = vmul.f32 1.0, %v856
        %v858 = vsel %vm821, %v803, 0.0
        %859 = vadd.xlane.f32.xlu0 %v858
        %v860 = vpop.xlane.xlu0 %859
        %v861 = vsel %vm821, %v808, 0.0
        %862 = vadd.xlane.f32.xlu0 %v861
        %v863 = vpop.xlane.xlu0 %862
        %v864 = vsel %vm821, %v813, 0.0
        %865 = vadd.xlane.f32.xlu0 %v864
        %v866 = vpop.xlane.xlu0 %865
        %v867 = vsel %vm821, %v818, 0.0
        %868 = vadd.xlane.f32.xlu0 %v867
        %v869 = vpop.xlane.xlu0 %868
        %v870 = vxor.u32 %v860, 2147483648
        %v871 = vxor.u32 %v863, 2147483648
        %v872 = vxor.u32 %v866, 2147483648
        %v873 = vxor.u32 %v869, 2147483648
        %v874 = vmul.f32 %v870, 1.442695
        %v875 = vpow.pop %v874
        %v876 = vmul.f32 %v871, 1.442695
        %v877 = vpow.pop %v876
        %v878 = vmul.f32 %v872, 1.442695
        %v879 = vpow.pop %v878
        %v880 = vmul.f32 %v873, 1.442695
        %v881 = vpow.pop %v880
        %v882 = vadd.f32 %v875, 1.0
        %v883 = vadd.f32 %v877, 1.0
        %v884 = vadd.f32 %v879, 1.0
        %v885 = vadd.f32 %v881, 1.0
        %v886 = vrcp.pop %v882
        %v887 = vmul.f32 1.0, %v886
        %v888 = vrcp.pop %v883
        %v889 = vmul.f32 1.0, %v888
        %v890 = vrcp.pop %v884
        %v891 = vmul.f32 1.0, %v890
        %v892 = vrcp.pop %v885
        %v893 = vmul.f32 1.0, %v892
        %v894 = vmul.f32 %v851, %v380
        %v895 = vmul.f32 %v851, %v381
        %v896 = vmul.f32 %v853, %v382
        %v897 = vmul.f32 %v853, %v383
        %v898 = vmul.f32 %v855, %v384
        %v899 = vmul.f32 %v855, %v385
        %v900 = vmul.f32 %v857, %v386
        %v901 = vmul.f32 %v857, %v387
        %v902 = vmul.f32 %v887, %v388
        %v903 = vmul.f32 %v887, %v389
        %v904 = vmul.f32 %v889, %v390
        %v905 = vmul.f32 %v889, %v391
        %v906 = vmul.f32 %v891, %v392
        %v907 = vmul.f32 %v891, %v393
        %v908 = vmul.f32 %v893, %v394
        %v909 = vmul.f32 %v893, %v395
        %v910 = vadd.f32 %v894, %v902
        %v911 = vadd.f32 %v895, %v903
        %v912 = vadd.f32 %v896, %v904
        %v913 = vadd.f32 %v897, %v905
        %v914 = vadd.f32 %v898, %v906
        %v915 = vadd.f32 %v899, %v907
        %v916 = vadd.f32 %v900, %v908
        %v917 = vadd.f32 %v901, %v909
        %v918 = vadd.f32 %v910, %v912
        %v919 = vadd.f32 %v918, %v914
        %v920 = vadd.f32 %v919, %v916
        %v921 = vrot.slane %v920, 4
        %v922 = vadd.f32 %v920, %v921
        %v923 = vrot.slane %v922, 2
        %v924 = vadd.f32 %v922, %v923
        %v925 = vrot.slane %v924, 1
        %v926 = vadd.f32 %v924, %v925
        %v927 = vadd.f32 %v911, %v913
        %v928 = vadd.f32 %v927, %v915
        %v929 = vadd.f32 %v928, %v917
        %v930 = vrot.slane %v929, 4
        %v931 = vadd.f32 %v929, %v930
        %v932 = vrot.slane %v931, 2
        %v933 = vadd.f32 %v931, %v932
        %v934 = vrot.slane %v933, 1
        %v935 = vadd.f32 %v933, %v934
        %v936 = vrcp.pop 32.0
        %v937 = vmul.f32 %v926, %v936
        %v938 = vmul.f32 %v935, %v936
        %v939 = vmax.f32 %v910, %v914
        %v940 = vmax.f32 %v912, %v916
        %v941 = vmax.f32 %v939, %v940
        %v942 = vrot.slane %v941, 4
        %v943 = vmax.f32 %v941, %v942
        %v944 = vrot.slane %v943, 2
        %v945 = vmax.f32 %v943, %v944
        %v946 = vrot.slane %v945, 1
        %v947 = vmax.f32 %v945, %v946
        %v948 = vmax.f32 %v911, %v915
        %v949 = vmax.f32 %v913, %v917
        %v950 = vmax.f32 %v948, %v949
        %v951 = vrot.slane %v950, 4
        %v952 = vmax.f32 %v950, %v951
        %v953 = vrot.slane %v952, 2
        %v954 = vmax.f32 %v952, %v953
        %v955 = vrot.slane %v954, 1
        %v956 = vmax.f32 %v954, %v955
        %v957 = vld [vmem:[#allocation8] sm:$0xff]
        %v958 = vld [vmem:[#allocation8 + $0x8] sm:$0xff]
        %v959 = vld [vmem:[#allocation8 + $0x10] sm:$0xff]
        %v960 = vld [vmem:[#allocation8 + $0x18] sm:$0xff]
        %v961 = vld [vmem:[#allocation8 + $0x20] sm:$0xff]
        %v962 = vld [vmem:[#allocation8 + $0x28] sm:$0xff]
        %v963 = vld [vmem:[#allocation8 + $0x30] sm:$0xff]
        %v964 = vld [vmem:[#allocation8 + $0x38] sm:$0xff]
        %v965 = vld [vmem:[#allocation8 + $0x40] sm:$0xff]
        %v966 = vld [vmem:[#allocation8 + $0x48] sm:$0xff]
        %v967 = vld [vmem:[#allocation8 + $0x50] sm:$0xff]
        %v968 = vld [vmem:[#allocation8 + $0x58] sm:$0xff]
        %v969 = vld [vmem:[#allocation8 + $0x60] sm:$0xff]
        %v970 = vld [vmem:[#allocation8 + $0x68] sm:$0xff]
        %v971 = vld [vmem:[#allocation8 + $0x70] sm:$0xff]
        %v972 = vld [vmem:[#allocation8 + $0x78] sm:$0xff]
        %v973 = vld [vmem:[#allocation8 + $0x80] sm:$0xff]
        %v974 = vld [vmem:[#allocation8 + $0x88] sm:$0xff]
        %v975 = vld [vmem:[#allocation8 + $0x90] sm:$0xff]
        %v976 = vld [vmem:[#allocation8 + $0x98] sm:$0xff]
        %v977 = vld [vmem:[#allocation8 + $0xa0] sm:$0xff]
        %v978 = vld [vmem:[#allocation8 + $0xa8] sm:$0xff]
        %v979 = vld [vmem:[#allocation8 + $0xb0] sm:$0xff]
        %v980 = vld [vmem:[#allocation8 + $0xb8] sm:$0xff]
        %v981 = vld [vmem:[#allocation8 + $0xc0] sm:$0xff]
        %v982 = vld [vmem:[#allocation8 + $0xc8] sm:$0xff]
        %v983 = vld [vmem:[#allocation8 + $0xd0] sm:$0xff]
        %v984 = vld [vmem:[#allocation8 + $0xd8] sm:$0xff]
        %v985 = vld [vmem:[#allocation8 + $0xe0] sm:$0xff]
        %v986 = vld [vmem:[#allocation8 + $0xe8] sm:$0xff]
        %v987 = vld [vmem:[#allocation8 + $0xf0] sm:$0xff]
        %v988 = vld [vmem:[#allocation8 + $0xf8] sm:$0xff]
        %v989 = vld [vmem:[#allocation8 + $0x100] sm:$0xff]
        %v990 = vld [vmem:[#allocation8 + $0x108] sm:$0xff]
        %v991 = vld [vmem:[#allocation8 + $0x110] sm:$0xff]
        %v992 = vld [vmem:[#allocation8 + $0x118] sm:$0xff]
        %v993 = vld [vmem:[#allocation8 + $0x120] sm:$0xff]
        %v994 = vld [vmem:[#allocation8 + $0x128] sm:$0xff]
        %v995 = vld [vmem:[#allocation8 + $0x130] sm:$0xff]
        %v996 = vld [vmem:[#allocation8 + $0x138] sm:$0xff]
        %v997 = vld [vmem:[#allocation8 + $0x140] sm:$0xff]
        %v998 = vld [vmem:[#allocation8 + $0x148] sm:$0xff]
        %v999 = vld [vmem:[#allocation8 + $0x150] sm:$0xff]
        %v1000 = vld [vmem:[#allocation8 + $0x158] sm:$0xff]
        %v1001 = vld [vmem:[#allocation8 + $0x160] sm:$0xff]
        %v1002 = vld [vmem:[#allocation8 + $0x168] sm:$0xff]
        %v1003 = vld [vmem:[#allocation8 + $0x170] sm:$0xff]
        %v1004 = vld [vmem:[#allocation8 + $0x178] sm:$0xff]
        %v1005 = vld [vmem:[#allocation8 + $0x180] sm:$0xff]
        %v1006 = vld [vmem:[#allocation8 + $0x188] sm:$0xff]
        %v1007 = vld [vmem:[#allocation8 + $0x190] sm:$0xff]
        %v1008 = vld [vmem:[#allocation8 + $0x198] sm:$0xff]
        %v1009 = vld [vmem:[#allocation8 + $0x1a0] sm:$0xff]
        %v1010 = vld [vmem:[#allocation8 + $0x1a8] sm:$0xff]
        %v1011 = vld [vmem:[#allocation8 + $0x1b0] sm:$0xff]
        %v1012 = vld [vmem:[#allocation8 + $0x1b8] sm:$0xff]
        %v1013 = vld [vmem:[#allocation8 + $0x1c0] sm:$0xff]
        %v1014 = vld [vmem:[#allocation8 + $0x1c8] sm:$0xff]
        %v1015 = vld [vmem:[#allocation8 + $0x1d0] sm:$0xff]
        %v1016 = vld [vmem:[#allocation8 + $0x1d8] sm:$0xff]
        %v1017 = vld [vmem:[#allocation8 + $0x1e0] sm:$0xff]
        %v1018 = vld [vmem:[#allocation8 + $0x1e8] sm:$0xff]
        %v1019 = vld [vmem:[#allocation8 + $0x1f0] sm:$0xff]
        %v1020 = vld [vmem:[#allocation8 + $0x1f8] sm:$0xff]
        %s1021 = scalar_lea.vmem [#allocation8], 512
        %v1022 = vld [vmem:[%s1021] sm:$0xff]
        %v1023 = vld [vmem:[%s1021 + $0x8] sm:$0xff]
        %v1024 = vld [vmem:[%s1021 + $0x10] sm:$0xff]
        %v1025 = vld [vmem:[%s1021 + $0x18] sm:$0xff]
        %v1026 = vld [vmem:[%s1021 + $0x20] sm:$0xff]
        %v1027 = vld [vmem:[%s1021 + $0x28] sm:$0xff]
        %v1028 = vld [vmem:[%s1021 + $0x30] sm:$0xff]
        %v1029 = vld [vmem:[%s1021 + $0x38] sm:$0xff]
        %v1030 = vld [vmem:[%s1021 + $0x40] sm:$0xff]
        %v1031 = vld [vmem:[%s1021 + $0x48] sm:$0xff]
        %v1032 = vld [vmem:[%s1021 + $0x50] sm:$0xff]
        %v1033 = vld [vmem:[%s1021 + $0x58] sm:$0xff]
        %v1034 = vld [vmem:[%s1021 + $0x60] sm:$0xff]
        %v1035 = vld [vmem:[%s1021 + $0x68] sm:$0xff]
        %v1036 = vld [vmem:[%s1021 + $0x70] sm:$0xff]
        %v1037 = vld [vmem:[%s1021 + $0x78] sm:$0xff]
        %v1038 = vld [vmem:[%s1021 + $0x80] sm:$0xff]
        %v1039 = vld [vmem:[%s1021 + $0x88] sm:$0xff]
        %v1040 = vld [vmem:[%s1021 + $0x90] sm:$0xff]
        %v1041 = vld [vmem:[%s1021 + $0x98] sm:$0xff]
        %v1042 = vld [vmem:[%s1021 + $0xa0] sm:$0xff]
        %v1043 = vld [vmem:[%s1021 + $0xa8] sm:$0xff]
        %v1044 = vld [vmem:[%s1021 + $0xb0] sm:$0xff]
        %v1045 = vld [vmem:[%s1021 + $0xb8] sm:$0xff]
        %v1046 = vld [vmem:[%s1021 + $0xc0] sm:$0xff]
        %v1047 = vld [vmem:[%s1021 + $0xc8] sm:$0xff]
        %v1048 = vld [vmem:[%s1021 + $0xd0] sm:$0xff]
        %v1049 = vld [vmem:[%s1021 + $0xd8] sm:$0xff]
        %v1050 = vld [vmem:[%s1021 + $0xe0] sm:$0xff]
        %v1051 = vld [vmem:[%s1021 + $0xe8] sm:$0xff]
        %v1052 = vld [vmem:[%s1021 + $0xf0] sm:$0xff]
        %v1053 = vld [vmem:[%s1021 + $0xf8] sm:$0xff]
        %v1054 = vld [vmem:[%s1021 + $0x100] sm:$0xff]
        %v1055 = vld [vmem:[%s1021 + $0x108] sm:$0xff]
        %v1056 = vld [vmem:[%s1021 + $0x110] sm:$0xff]
        %v1057 = vld [vmem:[%s1021 + $0x118] sm:$0xff]
        %v1058 = vld [vmem:[%s1021 + $0x120] sm:$0xff]
        %v1059 = vld [vmem:[%s1021 + $0x128] sm:$0xff]
        %v1060 = vld [vmem:[%s1021 + $0x130] sm:$0xff]
        %v1061 = vld [vmem:[%s1021 + $0x138] sm:$0xff]
        %v1062 = vld [vmem:[%s1021 + $0x140] sm:$0xff]
        %v1063 = vld [vmem:[%s1021 + $0x148] sm:$0xff]
        %v1064 = vld [vmem:[%s1021 + $0x150] sm:$0xff]
        %v1065 = vld [vmem:[%s1021 + $0x158] sm:$0xff]
        %v1066 = vld [vmem:[%s1021 + $0x160] sm:$0xff]
        %v1067 = vld [vmem:[%s1021 + $0x168] sm:$0xff]
        %v1068 = vld [vmem:[%s1021 + $0x170] sm:$0xff]
        %v1069 = vld [vmem:[%s1021 + $0x178] sm:$0xff]
        %v1070 = vld [vmem:[%s1021 + $0x180] sm:$0xff]
        %v1071 = vld [vmem:[%s1021 + $0x188] sm:$0xff]
        %v1072 = vld [vmem:[%s1021 + $0x190] sm:$0xff]
        %v1073 = vld [vmem:[%s1021 + $0x198] sm:$0xff]
        %v1074 = vld [vmem:[%s1021 + $0x1a0] sm:$0xff]
        %v1075 = vld [vmem:[%s1021 + $0x1a8] sm:$0xff]
        %v1076 = vld [vmem:[%s1021 + $0x1b0] sm:$0xff]
        %v1077 = vld [vmem:[%s1021 + $0x1b8] sm:$0xff]
        %v1078 = vld [vmem:[%s1021 + $0x1c0] sm:$0xff]
        %v1079 = vld [vmem:[%s1021 + $0x1c8] sm:$0xff]
        %v1080 = vld [vmem:[%s1021 + $0x1d0] sm:$0xff]
        %v1081 = vld [vmem:[%s1021 + $0x1d8] sm:$0xff]
        %v1082 = vld [vmem:[%s1021 + $0x1e0] sm:$0xff]
        %v1083 = vld [vmem:[%s1021 + $0x1e8] sm:$0xff]
        %v1084 = vld [vmem:[%s1021 + $0x1f0] sm:$0xff]
        %v1085 = vld [vmem:[%s1021 + $0x1f8] sm:$0xff]
        %1086 = vmatprep.subr.mxu0 %v1053
        %1087 = vmatpush1.msra.mxu0 %v1052
        %1088 = vmatprep.subr.mxu0 %v1051
        %1089 = vmatpush1.msra.mxu0 %v1050
        %1090 = vmatprep.subr.mxu0 %v1049
        %1091 = vmatpush1.msra.mxu0 %v1048
        %1092 = vmatprep.subr.mxu0 %v1047
        %1093 = vmatpush1.msra.mxu0 %v1046
        %1094 = vmatprep.subr.mxu0 %v1045
        %1095 = vmatpush1.msra.mxu0 %v1044
        %1096 = vmatprep.subr.mxu0 %v1043
        %1097 = vmatpush1.msra.mxu0 %v1042
        %1098 = vmatprep.subr.mxu0 %v1041
        %1099 = vmatpush1.msra.mxu0 %v1040
        %1100 = vmatprep.subr.mxu0 %v1039
        %1101 = vmatpush1.msra.mxu0 %v1038
        %1102 = vmatprep.subr.mxu0 %v1037
        %1103 = vmatpush1.msra.mxu0 %v1036
        %1104 = vmatprep.subr.mxu0 %v1035
        %1105 = vmatpush1.msra.mxu0 %v1034
        %1106 = vmatprep.subr.mxu0 %v1033
        %1107 = vmatpush1.msra.mxu0 %v1032
        %1108 = vmatprep.subr.mxu0 %v1031
        %1109 = vmatpush1.msra.mxu0 %v1030
        %1110 = vmatprep.subr.mxu0 %v1029
        %1111 = vmatpush1.msra.mxu0 %v1028
        %1112 = vmatprep.subr.mxu0 %v1027
        %1113 = vmatpush1.msra.mxu0 %v1026
        %1114 = vmatprep.subr.mxu0 %v1025
        %1115 = vmatpush1.msra.mxu0 %v1024
        %1116 = vmatprep.subr.mxu0 %v1023
        %1117 = vmatpush1.msra.mxu0 %v1022
        %1118 = vmatprep.subr.mxu0 %v1085
        %1119 = vmatpush2.msra.mxu0 %v1084
        %1120 = vmatprep.subr.mxu0 %v1083
        %1121 = vmatpush2.msra.mxu0 %v1082
        %1122 = vmatprep.subr.mxu0 %v1081
        %1123 = vmatpush2.msra.mxu0 %v1080
        %1124 = vmatprep.subr.mxu0 %v1079
        %1125 = vmatpush2.msra.mxu0 %v1078
        %1126 = vmatprep.subr.mxu0 %v1077
        %1127 = vmatpush2.msra.mxu0 %v1076
        %1128 = vmatprep.subr.mxu0 %v1075
        %1129 = vmatpush2.msra.mxu0 %v1074
        %1130 = vmatprep.subr.mxu0 %v1073
        %1131 = vmatpush2.msra.mxu0 %v1072
        %1132 = vmatprep.subr.mxu0 %v1071
        %1133 = vmatpush2.msra.mxu0 %v1070
        %1134 = vmatprep.subr.mxu0 %v1069
        %1135 = vmatpush2.msra.mxu0 %v1068
        %1136 = vmatprep.subr.mxu0 %v1067
        %1137 = vmatpush2.msra.mxu0 %v1066
        %1138 = vmatprep.subr.mxu0 %v1065
        %1139 = vmatpush2.msra.mxu0 %v1064
        %1140 = vmatprep.subr.mxu0 %v1063
        %1141 = vmatpush2.msra.mxu0 %v1062
        %1142 = vmatprep.subr.mxu0 %v1061
        %1143 = vmatpush2.msra.mxu0 %v1060
        %1144 = vmatprep.subr.mxu0 %v1059
        %1145 = vmatpush2.msra.mxu0 %v1058
        %1146 = vmatprep.subr.mxu0 %v1057
        %1147 = vmatpush2.msra.mxu0 %v1056
        %1148 = vmatprep.subr.mxu0 %v1055
        %1149 = vmatpush2.msra.mxu0 %v1054
        %1150 = vmatprep.mubr.f32.mxu0 %v956
        %1151 = vmatmul.mubr.f32.gmra.mxu0 %v947
        %v1152 = vpop.f32.mrf.mxu0
        %v1153 = vadd.f32 0.0, %v1152
        %v1154 = vpop.f32.mrf.mxu0
        %v1155 = vadd.f32 0.0, %v1154
        %1156 = vdwg.mxu0
        %1157 = vmatprep.subr.mxu0 %v988
        %1158 = vmatpush1.msra.mxu0 %v987
        %1159 = vmatprep.subr.mxu0 %v986
        %1160 = vmatpush1.msra.mxu0 %v985
        %1161 = vmatprep.subr.mxu0 %v984
        %1162 = vmatpush1.msra.mxu0 %v983
        %1163 = vmatprep.subr.mxu0 %v982
        %1164 = vmatpush1.msra.mxu0 %v981
        %1165 = vmatprep.subr.mxu0 %v980
        %1166 = vmatpush1.msra.mxu0 %v979
        %1167 = vmatprep.subr.mxu0 %v978
        %1168 = vmatpush1.msra.mxu0 %v977
        %1169 = vmatprep.subr.mxu0 %v976
        %1170 = vmatpush1.msra.mxu0 %v975
        %1171 = vmatprep.subr.mxu0 %v974
        %1172 = vmatpush1.msra.mxu0 %v973
        %1173 = vmatprep.subr.mxu0 %v972
        %1174 = vmatpush1.msra.mxu0 %v971
        %1175 = vmatprep.subr.mxu0 %v970
        %1176 = vmatpush1.msra.mxu0 %v969
        %1177 = vmatprep.subr.mxu0 %v968
        %1178 = vmatpush1.msra.mxu0 %v967
        %1179 = vmatprep.subr.mxu0 %v966
        %1180 = vmatpush1.msra.mxu0 %v965
        %1181 = vmatprep.subr.mxu0 %v964
        %1182 = vmatpush1.msra.mxu0 %v963
        %1183 = vmatprep.subr.mxu0 %v962
        %1184 = vmatpush1.msra.mxu0 %v961
        %1185 = vmatprep.subr.mxu0 %v960
        %1186 = vmatpush1.msra.mxu0 %v959
        %1187 = vmatprep.subr.mxu0 %v958
        %1188 = vmatpush1.msra.mxu0 %v957
        %1189 = vmatprep.subr.mxu0 %v1020
        %1190 = vmatpush2.msra.mxu0 %v1019
        %1191 = vmatprep.subr.mxu0 %v1018
        %1192 = vmatpush2.msra.mxu0 %v1017
        %1193 = vmatprep.subr.mxu0 %v1016
        %1194 = vmatpush2.msra.mxu0 %v1015
        %1195 = vmatprep.subr.mxu0 %v1014
        %1196 = vmatpush2.msra.mxu0 %v1013
        %1197 = vmatprep.subr.mxu0 %v1012
        %1198 = vmatpush2.msra.mxu0 %v1011
        %1199 = vmatprep.subr.mxu0 %v1010
        %1200 = vmatpush2.msra.mxu0 %v1009
        %1201 = vmatprep.subr.mxu0 %v1008
        %1202 = vmatpush2.msra.mxu0 %v1007
        %1203 = vmatprep.subr.mxu0 %v1006
        %1204 = vmatpush2.msra.mxu0 %v1005
        %1205 = vmatprep.subr.mxu0 %v1004
        %1206 = vmatpush2.msra.mxu0 %v1003
        %1207 = vmatprep.subr.mxu0 %v1002
        %1208 = vmatpush2.msra.mxu0 %v1001
        %1209 = vmatprep.subr.mxu0 %v1000
        %1210 = vmatpush2.msra.mxu0 %v999
        %1211 = vmatprep.subr.mxu0 %v998
        %1212 = vmatpush2.msra.mxu0 %v997
        %1213 = vmatprep.subr.mxu0 %v996
        %1214 = vmatpush2.msra.mxu0 %v995
        %1215 = vmatprep.subr.mxu0 %v994
        %1216 = vmatpush2.msra.mxu0 %v993
        %1217 = vmatprep.subr.mxu0 %v992
        %1218 = vmatpush2.msra.mxu0 %v991
        %1219 = vmatprep.subr.mxu0 %v990
        %1220 = vmatpush2.msra.mxu0 %v989
        %1221 = vmatprep.mubr.f32.mxu0 %v938
        %1222 = vmatmul.mubr.f32.gmra.mxu0 %v937
        %v1223 = vpop.f32.mrf.mxu0
        %v1224 = vadd.f32 %v1153, %v1223
        %v1225 = vpop.f32.mrf.mxu0
        %v1226 = vadd.f32 %v1155, %v1225
        %1227 = vdwg.mxu0
        %v1228 = vstv %s379
        %v1229 = vadd.f32 %v1224, %v1228
        %v1230 = vadd.f32 %v1226, %v1228
        %v1231 = vxor.u32 %v1229, 2147483648
        %v1232 = vxor.u32 %v1230, 2147483648
        %v1233 = vmul.f32 %v1231, 1.442695
        %v1234 = vpow.pop %v1233
        %v1235 = vmul.f32 %v1232, 1.442695
        %v1236 = vpow.pop %v1235
        %v1237 = vadd.f32 %v1234, 1.0
        %v1238 = vadd.f32 %v1236, 1.0
        %v1239 = vrcp.pop %v1237
        %v1240 = vmul.f32 1.0, %v1239
        %v1241 = vrcp.pop %v1238
        %v1242 = vmul.f32 1.0, %v1241
        %v1243 = vlaneseq
        %v1244 = vshrl.u32 %v1243, 7
        %v1245 = vsub.s32 0, %v1244
        %v1246 = vrot.slane %v1240, %v1245
        %v1247 = vlaneseq
        %v1248 = vshrl.u32 %v1247, 7
        %v1249 = vsub.s32 0, %v1248
        %v1250 = vrot.slane %v1242, %v1249
        %v1251 = vmul.f32 %v1246, %v910
        %v1252 = vmul.f32 %v1250, %v911
        %v1253 = vmul.f32 %v1246, %v912
        %v1254 = vmul.f32 %v1250, %v913
        %v1255 = vmul.f32 %v1246, %v914
        %v1256 = vmul.f32 %v1250, %v915
        %v1257 = vmul.f32 %v1246, %v916
        %v1258 = vmul.f32 %v1250, %v917
        %1259 = vst [vmem:[%s378] sm:$0xff] %v1251
        %1260 = vst [vmem:[%s378 + $0x8] sm:$0xff] %v1252
        %1261 = vst [vmem:[%s378 + $0x10] sm:$0xff] %v1253
        %1262 = vst [vmem:[%s378 + $0x18] sm:$0xff] %v1254
        %1263 = vst [vmem:[%s378 + $0x20] sm:$0xff] %v1255
        %1264 = vst [vmem:[%s378 + $0x28] sm:$0xff] %v1256
        %1265 = vst [vmem:[%s378 + $0x30] sm:$0xff] %v1257
        %1266 = vst [vmem:[%s378 + $0x38] sm:$0xff] %v1258
        %s1267 = sand.u32 %s215, 1
        %s1268 = scalar_lea.sflag [#allocation5], %s1267
        %s1269 = sand.u32 %s215, 1
        %s1270 = smul.addr %s1269, 64
        %s1271 = scalar_lea.vmem [#allocation9], %s1270
        // Predicated region
        $region65: #{tpu_custom_call.1} parent=51 // pred_check
          %p1272 = pneg %p225
        $region66: #{tpu_custom_call.1} parent=51 // pred_check_branch
          %1274 = sbr.rel (%p1272) target = $region68
        $region67: #{tpu_custom_call.1} parent=51 // pred_region
          %s1276 = ssub.s32 1024, 1024
          %1277 = vsyncadd %s1268, %s1276
          %s1278 = smul.addr %s29, 8
          %s1279 = smul.addr %s1278, 128
          %s1280 = scalar_lea.hbm %s8, %s1279
          %s1281 = sshll.u32 %s1271, 4
          %s1282 = int_to_ptr.vmem [resolvable:$true] %s1281
          %1287 = dma.vmem_to_hbm [thread:$0]  %s1282, 1024, %s1280, %s1268, 256, 256, 16
        $region68: #{tpu_custom_call.1} parent=51 // pred_fallthru
          _
      $region52: #{tpu_custom_call.1} parent=5 // pred_fallthru
        _
      %p1288 = scmp.le.s32.totalorder 2, %s24
      // Predicated region
      $region69: #{tpu_custom_call.1} parent=5 // pred_check
        %p1289 = pneg %p1288
      $region70: #{tpu_custom_call.1} parent=5 // pred_check_branch
        %1291 = sbr.rel (%p1289) target = $region72
      $region71: #{tpu_custom_call.1} parent=5 // pred_region
        %s1292 = ssub.s32 %s24, 2
        // Predicated region
        $region73: #{tpu_custom_call.1} parent=71 // pred_check
          %p1293 = pneg %p231
        $region74: #{tpu_custom_call.1} parent=71 // pred_check_branch
          %1295 = sbr.rel (%p1293) target = $region76
        $region75: #{tpu_custom_call.1} parent=71 // pred_region
          %s1296 = sand.u32 %s216, 1
          %s1297 = scalar_lea.sflag [#allocation5], %s1296
          %s1298 = sand.u32 %s216, 1
          %s1299 = smul.addr %s1298, 64
          %s1300 = scalar_lea.vmem [#allocation9], %s1299
          %1301 = dma.done %s1297, 1024
        $region76: #{tpu_custom_call.1} parent=71 // pred_fallthru
          _
      $region72: #{tpu_custom_call.1} parent=5 // pred_fallthru
        _
    $region6: #{tpu_custom_call.1} parent=1 // loop_footer
      %s28 = sadd.s32 1, %s24
    $region7: #{tpu_custom_call.1} parent=1 // loop_footer_branch
      %23 = sbr.rel target = $region3
    $region8: #{tpu_custom_call.1} parent=1 // loop_exit
      _
    %1302 = vsyncpa [#allocation4], 1
    %s1303 = scalar_lea.sflag [#allocation4], 1
    %1304 = vsyncpa %s1303, 1
    %1305 = vsyncpa [#allocation7], 1
    %s1306 = scalar_lea.sflag [#allocation7], 1
    %1307 = vsyncpa %s1306, 1
    %1308 = vsyncpa [#allocation5], 1
    %s1309 = scalar_lea.sflag [#allocation5], 1
    %1310 = vsyncpa %s1309, 1

</llo_original>
